<compile_context>
chip_gen: v5e
topology: v5e:2x2
jax: 0.10.0
libtpu: 0.0.40
codegen_flags: <defaults>
</compile_context>

<pallas_src>
import functools

import jax
import jax.numpy as jnp
from jax.experimental import pallas as pl
from jax.experimental.pallas import tpu as pltpu

LN_EPS = 1e-5


def ffn_kernel(x_ref, w1_ref, w2_ref, bias_ref, o_ref, *, inner_chunk):
    """One (tile_m, D) row tile of: LayerNorm -> Linear -> Swish -> Linear."""
    tile_m, d = x_ref.shape
    inner = w1_ref.shape[1]
    n_chunks = inner // inner_chunk

    x = x_ref[...].astype(jnp.float32)                       # (TM, D)

    # --- LayerNorm statistics (affine pre-folded into W1/b1) ---
    # Centered two-pass variance: robust to large common offsets, all VPU work.
    mean = jnp.mean(x, axis=-1, keepdims=True)
    xc = x - mean
    var = jnp.mean(xc * xc, axis=-1, keepdims=True)
    x_hat = (xc * jax.lax.rsqrt(var + LN_EPS)).astype(jnp.bfloat16)

    # --- FFN: chunk the inner dim; bf16 MXU operands, f32 accumulation ---
    acc = jnp.zeros((tile_m, d), jnp.float32)
    for c in range(n_chunks):                                 # static unroll
        lo = c * inner_chunk
        hi = lo + inner_chunk
        h = jnp.dot(x_hat, w1_ref[:, lo:hi],
                    preferred_element_type=jnp.float32)       # (TM, chunk)
        h = h + bias_ref[:, lo:hi]                            # folded LN beta + b1
        h = h * jax.nn.sigmoid(h)                             # Swish (sigmoid -> EUP)
        # Dropout: identity (eval mode).
        acc = acc + jnp.dot(h.astype(jnp.bfloat16), w2_ref[lo:hi, :],
                            preferred_element_type=jnp.float32)

    o_ref[...] = (acc + bias_ref[:, inner:]).astype(o_ref.dtype)


def _pick_tile_m(m_rows):
    """Large row tiles (toward 512) but keep >=2 grid steps for v7x megacore."""
    half = -(-m_rows // 2)                    # ceil(M / 2)
    half = -(-half // 128) * 128              # round up to a 128-row multiple
    return int(min(512, max(128, half)))


@functools.partial(jax.jit, static_argnames=("tile_m", "out_dtype", "inner_chunk"))
def feed_forward_module(x, w1t_bf16, w2t_bf16, bias, *, tile_m=None,
                        out_dtype=jnp.float32, inner_chunk=512):
    B, T, D = x.shape
    inner = w1t_bf16.shape[1]
    assert w1t_bf16.shape == (D, inner)
    assert w2t_bf16.shape == (inner, D)
    assert bias.shape == (1, inner + D)

    M = B * T
    if tile_m is None:
        tile_m = _pick_tile_m(M)
    chunk = inner_chunk if (inner % inner_chunk == 0 and inner > inner_chunk) else inner

    # Stream activations as bf16 (halves HBM bytes). No padding: the ragged
    # last row tile is handled by OOB reads + masked stores.
    xm = x.reshape(M, D)
    if xm.dtype != jnp.bfloat16:
        xm = xm.astype(jnp.bfloat16)

    # Resident operands: whole array pinned in VMEM, single copy (no per-step
    # double-buffering of constant-index blocks).
    resident = pl.BlockSpec(memory_space=pltpu.MemorySpace.VMEM)

    # Explicit scoped-VMEM budget: resident weights + double-buffered streams.
    out_itemsize = jnp.dtype(out_dtype).itemsize
    resident_bytes = (w1t_bf16.size * w1t_bf16.dtype.itemsize
                      + w2t_bf16.size * w2t_bf16.dtype.itemsize
                      + bias.size * bias.dtype.itemsize)
    stream_bytes = 2 * tile_m * D * (xm.dtype.itemsize + out_itemsize)
    vmem_limit = int(min(64 * 1024 * 1024,
                         max(32 * 1024 * 1024,
                             2 * (resident_bytes + stream_bytes))))

    out = pl.pallas_call(
        functools.partial(ffn_kernel, inner_chunk=chunk),
        out_shape=jax.ShapeDtypeStruct((M, D), out_dtype),
        grid=(pl.cdiv(M, tile_m),),
        in_specs=[
            pl.BlockSpec((tile_m, D), lambda i: (i, 0)),   # x rows (streamed, bf16)
            resident,                                      # W1^T (bf16, LN folded)
            resident,                                      # W2^T (bf16)
            resident,                                      # packed biases (f32)
        ],
        out_specs=pl.BlockSpec((tile_m, D), lambda i: (i, 0)),
        compiler_params=pltpu.CompilerParams(
            dimension_semantics=("parallel",),
            vmem_limit_bytes=vmem_limit),
    )(xm, w1t_bf16, w2t_bf16, bias)

    return out.reshape(B, T, D)


def make_params(key, dim, expansion_factor):
    """Parameters in the PyTorch module's layout (Linear weight = (out, in))."""
    inner = dim * expansion_factor
    ks = jax.random.split(key, 6)
    s1 = 1.0 / jnp.sqrt(dim)
    s2 = 1.0 / jnp.sqrt(inner)
    return {
        "ln_g": (1.0 + 0.1 * jax.random.normal(ks[0], (dim,))).astype(jnp.float32),
        "ln_b": (0.1 * jax.random.normal(ks[1], (dim,))).astype(jnp.float32),
        "w1": (jax.random.normal(ks[2], (inner, dim)) * s1).astype(jnp.float32),
        "b1": (jax.random.normal(ks[3], (inner,)) * s1).astype(jnp.float32),
        "w2": (jax.random.normal(ks[4], (dim, inner)) * s2).astype(jnp.float32),
        "b2": (jax.random.normal(ks[5], (dim,)) * s2).astype(jnp.float32),
    }


def fold_params(p):
    """Fold LayerNorm affine into Linear #1 and pack biases; bf16 weights for MXU."""
    w1t = p["w1"].T                                        # (dim, inner)
    w1t_folded = p["ln_g"][:, None] * w1t                  # diag(gamma) @ W1^T
    b1_folded = p["ln_b"] @ w1t + p["b1"]                  # beta @ W1^T + b1
    w2t = p["w2"].T                                        # (inner, dim)
    bias = jnp.concatenate([b1_folded, p["b2"]])[None, :].astype(jnp.float32)
    return (w1t_folded.astype(jnp.bfloat16),
            w2t.astype(jnp.bfloat16),
            bias)


def reference_forward(x, p):
    """Pure-JAX reference mirroring the PyTorch module (eval mode, f32)."""
    mean = x.mean(-1, keepdims=True)
    var = ((x - mean) ** 2).mean(-1, keepdims=True)
    h = (x - mean) / jnp.sqrt(var + LN_EPS) * p["ln_g"] + p["ln_b"]
    h = h @ p["w1"].T + p["b1"]
    h = h * jax.nn.sigmoid(h)        # Swish
    # Dropout: identity in eval mode
    return h @ p["w2"].T + p["b2"]   # second Dropout also identity


if __name__ == "__main__":
    B, T, DIM = 2, 96, 128
    EXPANSION = 4

    key = jax.random.PRNGKey(0)
    kx, kp = jax.random.split(key)
    x = jax.random.normal(kx, (B, T, DIM), dtype=jnp.float32)
    params = make_params(kp, DIM, EXPANSION)
    w1t_bf16, w2t_bf16, bias = fold_params(params)

    # M = 192 rows -> tile_m = 128, grid = 2 (exercises the ragged last tile
    # with masked OOB stores and keeps both v7x TensorCores busy).
    out = feed_forward_module(x, w1t_bf16, w2t_bf16, bias)
    out = jax.block_until_ready(out)

    ref = reference_forward(x, params)
    assert out.shape == (B, T, DIM)
    assert out.dtype == jnp.float32

    # bf16 streamed activations + bf16 MXU operands + f32 accumulation:
    # compare with a relative-RMS check plus a loose elementwise bound.
    rms = jnp.sqrt(jnp.mean((out - ref) ** 2)) / (jnp.sqrt(jnp.mean(ref ** 2)) + 1e-8)
    assert rms < 2e-2, f"relative RMS error too large: {rms}"
    assert jnp.allclose(out, ref, atol=2e-1, rtol=1e-1), "elementwise error too large"

    print("KERNEL_OK")
</pallas_src>

<mosaic_0001>
module attributes {stable_mosaic.version = 11 : i64} {
  func.func @ffn_kernel(%arg0: i32, %arg1: memref<128x128xbf16, #tpu.memory_space<vmem>>, %arg2: memref<128x512xbf16, #tpu.memory_space<vmem>>, %arg3: memref<512x128xbf16, #tpu.memory_space<vmem>>, %arg4: memref<1x640xf32, #tpu.memory_space<vmem>>, %arg5: memref<128x128xf32, #tpu.memory_space<vmem>>) attributes {dimension_semantics = [#tpu.dimension_semantics<parallel>], iteration_bounds = array<i64: 2>, scalar_prefetch = 0 : i64, scratch_operands = 0 : i64, tpu.core_type = #tpu.core_type<tc>, window_params = [{transform_indices = @transform_0, window_bounds = array<i64: 128, 128>}, {pipeline_mode = #tpu.pipeline_mode<synchronous>, transform_indices = @transform_1, window_bounds = array<i64: 128, 512>}, {pipeline_mode = #tpu.pipeline_mode<synchronous>, transform_indices = @transform_2, window_bounds = array<i64: 512, 128>}, {pipeline_mode = #tpu.pipeline_mode<synchronous>, transform_indices = @transform_3, window_bounds = array<i64: 1, 640>}, {transform_indices = @transform_4, window_bounds = array<i64: 128, 128>}]} {
    %c0 = arith.constant 0 : index
    %c0_0 = arith.constant 0 : index
    %0 = vector.load %arg1[%c0, %c0_0] : memref<128x128xbf16, #tpu.memory_space<vmem>>, vector<128x128xbf16>
    %1 = arith.extf %0 : vector<128x128xbf16> to vector<128x128xf32>
    %cst = arith.constant dense<0.000000e+00> : vector<128xf32>
    %2 = vector.multi_reduction <add>, %1, %cst [1] : vector<128x128xf32> to vector<128xf32>
    %3 = vector.shape_cast %2 : vector<128xf32> to vector<128x1xf32>
    %cst_1 = arith.constant 1.280000e+02 : f32
    %4 = vector.broadcast %cst_1 : f32 to vector<128x1xf32>
    %5 = arith.divf %3, %4 : vector<128x1xf32>
    %6 = vector.broadcast %5 : vector<128x1xf32> to vector<128x128xf32>
    %7 = arith.subf %1, %6 : vector<128x128xf32>
    %8 = arith.mulf %7, %7 : vector<128x128xf32>
    %cst_2 = arith.constant dense<0.000000e+00> : vector<128xf32>
    %9 = vector.multi_reduction <add>, %8, %cst_2 [1] : vector<128x128xf32> to vector<128xf32>
    %10 = vector.shape_cast %9 : vector<128xf32> to vector<128x1xf32>
    %cst_3 = arith.constant 1.280000e+02 : f32
    %11 = vector.broadcast %cst_3 : f32 to vector<128x1xf32>
    %12 = arith.divf %10, %11 : vector<128x1xf32>
    %cst_4 = arith.constant 9.99999974E-6 : f32
    %13 = vector.broadcast %cst_4 : f32 to vector<128x1xf32>
    %14 = arith.addf %12, %13 : vector<128x1xf32>
    %15 = math.rsqrt %14 : vector<128x1xf32>
    %16 = vector.broadcast %15 : vector<128x1xf32> to vector<128x128xf32>
    %17 = arith.mulf %7, %16 : vector<128x128xf32>
    %18 = arith.truncf %17 : vector<128x128xf32> to vector<128x128xbf16>
    %cst_5 = arith.constant 0.000000e+00 : f32
    %19 = vector.broadcast %cst_5 : f32 to vector<128x128xf32>
    %c0_6 = arith.constant 0 : index
    %c0_7 = arith.constant 0 : index
    %20 = vector.load %arg2[%c0_6, %c0_7] : memref<128x512xbf16, #tpu.memory_space<vmem>>, vector<128x512xbf16>
    %cst_8 = arith.constant dense<0.000000e+00> : vector<128x512xf32>
    %21 = tpu.matmul %18, %20, %cst_8 {dimension_numbers = #tpu.dot_dimension_numbers<[1], [0], [0], [1], [0, 0, 1, 1], [], []>} : vector<128x128xbf16>, vector<128x512xbf16>, vector<128x512xf32> -> vector<128x512xf32>
    %c0_9 = arith.constant 0 : index
    %c0_10 = arith.constant 0 : index
    %22 = vector.load %arg4[%c0_9, %c0_10] : memref<1x640xf32, #tpu.memory_space<vmem>>, vector<1x512xf32>
    %23 = vector.broadcast %22 : vector<1x512xf32> to vector<128x512xf32>
    %24 = arith.addf %21, %23 : vector<128x512xf32>
    %25 = arith.negf %24 : vector<128x512xf32>
    %26 = math.exp %25 : vector<128x512xf32>
    %cst_11 = arith.constant 1.000000e+00 : f32
    %27 = vector.broadcast %cst_11 : f32 to vector<128x512xf32>
    %28 = arith.addf %27, %26 : vector<128x512xf32>
    %29 = arith.divf %27, %28 : vector<128x512xf32>
    %30 = arith.mulf %24, %29 : vector<128x512xf32>
    %31 = arith.truncf %30 : vector<128x512xf32> to vector<128x512xbf16>
    %c0_12 = arith.constant 0 : index
    %c0_13 = arith.constant 0 : index
    %32 = vector.load %arg3[%c0_12, %c0_13] : memref<512x128xbf16, #tpu.memory_space<vmem>>, vector<512x128xbf16>
    %cst_14 = arith.constant dense<0.000000e+00> : vector<128x128xf32>
    %33 = tpu.matmul %31, %32, %cst_14 {dimension_numbers = #tpu.dot_dimension_numbers<[1], [0], [0], [1], [0, 0, 1, 1], [], []>} : vector<128x512xbf16>, vector<512x128xbf16>, vector<128x128xf32> -> vector<128x128xf32>
    %34 = arith.addf %19, %33 : vector<128x128xf32>
    %c0_15 = arith.constant 0 : index
    %c512 = arith.constant 512 : index
    %35 = vector.load %arg4[%c0_15, %c512] : memref<1x640xf32, #tpu.memory_space<vmem>>, vector<1x128xf32>
    %36 = vector.broadcast %35 : vector<1x128xf32> to vector<128x128xf32>
    %37 = arith.addf %34, %36 : vector<128x128xf32>
    %c0_16 = arith.constant 0 : index
    %c0_17 = arith.constant 0 : index
    %38 = vector.load %arg5[%c0_16, %c0_17] : memref<128x128xf32, #tpu.memory_space<vmem>>, vector<128x128xf32>
    tpu.vector_store %arg5[%c0_16, %c0_17], %37 {strides = array<i32>} : memref<128x128xf32, #tpu.memory_space<vmem>>, vector<128x128xf32>,
    return
  }
  func.func @transform_0(%arg0: i32) -> (i32, i32) {
    %c0_i32 = arith.constant 0 : i32
    %c0_i32_0 = arith.constant 0 : i32
    return %arg0, %c0_i32 : i32, i32
  }
  func.func @transform_1(%arg0: i32) -> (i32, i32) {
    %c0_i32 = arith.constant 0 : i32
    %c0_i32_0 = arith.constant 0 : i32
    %c0_i32_1 = arith.constant 0 : i32
    return %c0_i32, %c0_i32_0 : i32, i32
  }
  func.func @transform_2(%arg0: i32) -> (i32, i32) {
    %c0_i32 = arith.constant 0 : i32
    %c0_i32_0 = arith.constant 0 : i32
    %c0_i32_1 = arith.constant 0 : i32
    return %c0_i32, %c0_i32_0 : i32, i32
  }
  func.func @transform_3(%arg0: i32) -> (i32, i32) {
    %c0_i32 = arith.constant 0 : i32
    %c0_i32_0 = arith.constant 0 : i32
    %c0_i32_1 = arith.constant 0 : i32
    return %c0_i32, %c0_i32_0 : i32, i32
  }
  func.func @transform_4(%arg0: i32) -> (i32, i32) {
    %c0_i32 = arith.constant 0 : i32
    %c0_i32_0 = arith.constant 0 : i32
    return %arg0, %c0_i32 : i32, i32
  }
}

</mosaic_0001>

<llo_original>
// kernel: feed_forward_module.1
$region0: #{feed_forward_module.1}
  #allocation0 [shape = 'u32[]', space=smem, size = 0x4, offset = 0x4, fixed_abs, tag = 'smem constant byte address 0x4 - core index']
  #allocation1 [shape = 'u32[72,128]{1,0:T(1,128)}', space=vmem, size = 0x9000, scoped, tag = 'internal scratch']
  %s0 = inlined_call_operand.vmem [shape: bf16[192,128], index: 0, kind: input, shape index: {}]
  %s1 = inlined_call_operand.vmem [shape: bf16[128,512], index: 1, kind: input, shape index: {}]
  %s2 = inlined_call_operand.hbm [shape: bf16[512,128], index: 2, kind: input, shape index: {}]
  %s3 = inlined_call_operand.vmem [shape: f32[1,640], index: 3, kind: input, shape index: {}]
  %s4 = inlined_call_operand.hbm [shape: f32[192,128], index: 4, kind: output, shape index: {}]
  %s5 = sld [smem:[#allocation0]]
  $region53: #{feed_forward_module.1} parent=0
    _
  %s7 = ssub.s32 1, %s5
  %s8 = scalar_select 0, %s7, %s5
  $region1: #{feed_forward_module.1} parent=0
    #allocation2 [shape = 'u8[131072]{0}', space=vmem, size = 0x20000, scoped, tag = 'input window, operand 2, single buffered']
    #allocation3 [shape = 's32[2]{0}', space=sflag, size = 0x8, scoped, tag = 'scoped memory for feed_forward_module.1']
    #allocation4 [shape = 's32[2]{0}', space=sflag, size = 0x8, scoped, tag = 'scoped memory for feed_forward_module.1']
    #allocation5 [shape = 'u8[131072]{0}', space=vmem, size = 0x20000, scoped, tag = 'output window, operand 0']
    %9 = vsyncpa [#allocation3], 0
    %10 = vsyncpa [#allocation4], 0
    %s11 = scalar_lea.sflag [#allocation4], 1
    %12 = vsyncpa %s11, 0
    loop: start=0, step=1, limit=4
    $region2: #{feed_forward_module.1} parent=1 // loop_pre_header
      _
    $region3: #{feed_forward_module.1} parent=1 // loop_header
      %s14 = sphi 0, %s18
      %p15 = scmp.ge.s32.totalorder %s14, 4
      %s24 = sphi 0, %s26
      %s27 = sphi 0, %s24
      %s28 = sphi 0, %s27
      %s44 = sphi 0, %s28
      %s48 = sphi 0, %s48
      %s50 = sphi 0, %s48
      %s51 = sphi 0, %s50
      %s65 = sphi 0, %s51
      %s69 = sphi 0, %s69
      %s71 = sphi 0, %s69
      %s72 = sphi 0, %s71
      %s86 = sphi 0, %s72
      %s90 = sphi 0, %s90
      %s92 = sphi 0, %s90
      %s93 = sphi 0, %s92
      %s107 = sphi 0, %s93
      %s113 = sphi 0, %s115
      %s116 = sphi 0, %s113
      %s117 = sphi 0, %s116
      %s133 = sphi 0, %s117
    $region4: #{feed_forward_module.1} parent=1 // loop_header_branch
      %17 = sbr.rel (%p15) target = $region8
    $region5: #{feed_forward_module.1} parent=1 // loop_body
      %s19 = ssub.s32 %s14, 1
      %s20 = ssub.s32 %s14, 2
      %s21 = sadd.s32 %s14, 1
      %s22 = ssub.s32 %s14, %s21
      %p23 = scmp.eq.s32.totalorder %s22, 0
      %s25 = sadd.s32 %s24, 1
      %s26 = scalar_select %p23, %s24, %s25
      %p29 = pneg %p23
      %p30 = scmp.eq.s32.totalorder %s14, 1
      %p31 = por %p29, %p30
      %p32 = scmp.ne.s32.totalorder %s24, %s27
      %p33 = scmp.eq.s32.totalorder %s14, 0
      %p34 = por %p32, %p33
      %p35 = scmp.ne.s32.totalorder %s24, %s27
      %p36 = scmp.eq.s32.totalorder %s19, 1
      %p37 = por %p35, %p36
      %p38 = scmp.ne.s32.totalorder %s27, %s28
      %p39 = scmp.eq.s32.totalorder %s19, 0
      %p40 = por %p38, %p39
      %p41 = scmp.ne.s32.totalorder %s27, %s28
      %p42 = scmp.eq.s32.totalorder %s20, 1
      %p43 = por %p41, %p42
      %p45 = scmp.ne.s32.totalorder %s28, %s44
      %p46 = scmp.eq.s32.totalorder %s20, 0
      %p47 = por %p45, %p46
      %s49 = sadd.s32 %s48, 1
      %p52 = scmp.eq.s32.totalorder %s14, 1
      %p53 = scmp.ne.s32.totalorder %s48, %s50
      %p54 = scmp.eq.s32.totalorder %s14, 0
      %p55 = por %p53, %p54
      %p56 = scmp.ne.s32.totalorder %s48, %s50
      %p57 = scmp.eq.s32.totalorder %s19, 1
      %p58 = por %p56, %p57
      %p59 = scmp.ne.s32.totalorder %s50, %s51
      %p60 = scmp.eq.s32.totalorder %s19, 0
      %p61 = por %p59, %p60
      %p62 = scmp.ne.s32.totalorder %s50, %s51
      %p63 = scmp.eq.s32.totalorder %s20, 1
      %p64 = por %p62, %p63
      %p66 = scmp.ne.s32.totalorder %s51, %s65
      %p67 = scmp.eq.s32.totalorder %s20, 0
      %p68 = por %p66, %p67
      %s70 = sadd.s32 %s69, 1
      %p73 = scmp.eq.s32.totalorder %s14, 1
      %p74 = scmp.ne.s32.totalorder %s69, %s71
      %p75 = scmp.eq.s32.totalorder %s14, 0
      %p76 = por %p74, %p75
      %p77 = scmp.ne.s32.totalorder %s69, %s71
      %p78 = scmp.eq.s32.totalorder %s19, 1
      %p79 = por %p77, %p78
      %p80 = scmp.ne.s32.totalorder %s71, %s72
      %p81 = scmp.eq.s32.totalorder %s19, 0
      %p82 = por %p80, %p81
      %p83 = scmp.ne.s32.totalorder %s71, %s72
      %p84 = scmp.eq.s32.totalorder %s20, 1
      %p85 = por %p83, %p84
      %p87 = scmp.ne.s32.totalorder %s72, %s86
      %p88 = scmp.eq.s32.totalorder %s20, 0
      %p89 = por %p87, %p88
      %s91 = sadd.s32 %s90, 1
      %p94 = scmp.eq.s32.totalorder %s14, 1
      %p95 = scmp.ne.s32.totalorder %s90, %s92
      %p96 = scmp.eq.s32.totalorder %s14, 0
      %p97 = por %p95, %p96
      %p98 = scmp.ne.s32.totalorder %s90, %s92
      %p99 = scmp.eq.s32.totalorder %s19, 1
      %p100 = por %p98, %p99
      %p101 = scmp.ne.s32.totalorder %s92, %s93
      %p102 = scmp.eq.s32.totalorder %s19, 0
      %p103 = por %p101, %p102
      %p104 = scmp.ne.s32.totalorder %s92, %s93
      %p105 = scmp.eq.s32.totalorder %s20, 1
      %p106 = por %p104, %p105
      %p108 = scmp.ne.s32.totalorder %s93, %s107
      %p109 = scmp.eq.s32.totalorder %s20, 0
      %p110 = por %p108, %p109
      %s111 = ssub.s32 %s14, %s21
      %p112 = scmp.eq.s32.totalorder %s111, 0
      %s114 = sadd.s32 %s113, 1
      %s115 = scalar_select %p112, %s113, %s114
      %p118 = pneg %p112
      %p119 = scmp.eq.s32.totalorder %s14, 1
      %p120 = por %p118, %p119
      %p121 = scmp.ne.s32.totalorder %s113, %s116
      %p122 = scmp.eq.s32.totalorder %s14, 0
      %p123 = por %p121, %p122
      %p124 = scmp.ne.s32.totalorder %s113, %s116
      %p125 = scmp.eq.s32.totalorder %s19, 1
      %p126 = por %p124, %p125
      %p127 = scmp.ne.s32.totalorder %s116, %s117
      %p128 = scmp.eq.s32.totalorder %s19, 0
      %p129 = por %p127, %p128
      %p130 = scmp.ne.s32.totalorder %s116, %s117
      %p131 = scmp.eq.s32.totalorder %s20, 1
      %p132 = por %p130, %p131
      %p134 = scmp.ne.s32.totalorder %s117, %s133
      %p135 = scmp.eq.s32.totalorder %s20, 0
      %p136 = por %p134, %p135
      %p137 = scmp.le.s32.totalorder 1, %s14
      %p138 = scmp.lt.s32.totalorder %s14, 3
      %p139 = pnand %p137, %p138
      %p140 = pneg %p139
      // Predicated region
      $region9: #{feed_forward_module.1} parent=5 // pred_check
        _
      $region10: #{feed_forward_module.1} parent=5 // pred_check_branch
        %142 = sbr.rel (%p139) target = $region12
      $region11: #{feed_forward_module.1} parent=5 // pred_region
        %s143 = ssub.s32 %s14, 1
        // Predicated region
        $region13: #{feed_forward_module.1} parent=11 // pred_check
          %p144 = pneg %p61
        $region14: #{feed_forward_module.1} parent=11 // pred_check_branch
          %146 = sbr.rel (%p144) target = $region16
        $region15: #{feed_forward_module.1} parent=11 // pred_region
          _
        $region16: #{feed_forward_module.1} parent=11 // pred_fallthru
          _
        // Predicated region
        $region17: #{feed_forward_module.1} parent=11 // pred_check
          %p147 = pneg %p82
        $region18: #{feed_forward_module.1} parent=11 // pred_check_branch
          %149 = sbr.rel (%p147) target = $region20
        $region19: #{feed_forward_module.1} parent=11 // pred_region
          %151 = vsyncadd [#allocation3], 0
          %s152 = sshll.u32 %s2, 4
          %s153 = int_to_ptr.hbm [resolvable:$true] %s152
          %s154 = sshll.u32 [#allocation2], 4
          %s155 = int_to_ptr.vmem [resolvable:$true] %s154
          %160 = dma.hbm_to_vmem [thread:$0]  %s153, 4096, %s155, [#allocation3], 64, 64, 4
        $region20: #{feed_forward_module.1} parent=11 // pred_fallthru
          _
        // Predicated region
        $region21: #{feed_forward_module.1} parent=11 // pred_check
          %p161 = pneg %p103
        $region22: #{feed_forward_module.1} parent=11 // pred_check_branch
          %163 = sbr.rel (%p161) target = $region24
        $region23: #{feed_forward_module.1} parent=11 // pred_region
          _
        $region24: #{feed_forward_module.1} parent=11 // pred_fallthru
          _
      $region12: #{feed_forward_module.1} parent=5 // pred_fallthru
        _
      %p164 = scmp.lt.s32.totalorder %s14, 2
      // Predicated region
      $region25: #{feed_forward_module.1} parent=5 // pred_check
        %p165 = pneg %p164
      $region26: #{feed_forward_module.1} parent=5 // pred_check_branch
        %167 = sbr.rel (%p165) target = $region28
      $region27: #{feed_forward_module.1} parent=5 // pred_region
        // Predicated region
        $region29: #{feed_forward_module.1} parent=27 // pred_check
          %p168 = pneg %p34
        $region30: #{feed_forward_module.1} parent=27 // pred_check_branch
          %170 = sbr.rel (%p168) target = $region32
        $region31: #{feed_forward_module.1} parent=27 // pred_region
          %s171 = smul.u32 16, %s14
          %s172 = ssub.s32 24, %s171
          %p173 = scmp.lt.s32.totalorder %s172, 16
          %s174 = scalar_select %p173, %s172, 16
          %s175 = smul.u32 4, %s174
          %p176 = scmp.lt.s32.totalorder %s171, 23
          %s177 = scalar_select %p176, %s171, 23
          %s178 = smul.addr %s177, 4
          %s179 = scalar_lea.vmem %s0, %s178
          %s180 = smul.u32 16, %s14
          %s181 = ssub.s32 24, %s180
          %p182 = scmp.lt.s32.totalorder %s181, 16
          %s183 = scalar_select %p182, %s181, 16
          %s184 = smul.u32 4, %s183
        $region32: #{feed_forward_module.1} parent=27 // pred_fallthru
          _
      $region28: #{feed_forward_module.1} parent=5 // pred_fallthru
        _
      %p185 = scmp.le.s32.totalorder 1, %s14
      %p186 = scmp.lt.s32.totalorder %s14, 3
      %p187 = pnand %p185, %p186
      %p188 = pneg %p187
      // Predicated region
      $region33: #{feed_forward_module.1} parent=5 // pred_check
        _
      $region34: #{feed_forward_module.1} parent=5 // pred_check_branch
        %190 = sbr.rel (%p187) target = $region36
      $region35: #{feed_forward_module.1} parent=5 // pred_region
        %s191 = ssub.s32 %s14, 1
        // Predicated region
        $region37: #{feed_forward_module.1} parent=35 // pred_check
          %p192 = pneg %p82
        $region38: #{feed_forward_module.1} parent=35 // pred_check_branch
          %194 = sbr.rel (%p192) target = $region40
        $region39: #{feed_forward_module.1} parent=35 // pred_region
          %196 = dma.done [#allocation3], 4096
        $region40: #{feed_forward_module.1} parent=35 // pred_fallthru
          _
        %s197 = smul.u32 16, %s19
        %s198 = ssub.s32 24, %s197
        %p199 = scmp.lt.s32.totalorder %s198, 16
        %s200 = scalar_select %p199, %s198, 16
        %s201 = smul.u32 4, %s200
        %p202 = scmp.lt.s32.totalorder %s197, 23
        %s203 = scalar_select %p202, %s197, 23
        %s204 = smul.addr %s203, 4
        %s205 = scalar_lea.vmem %s0, %s204
        %p206 = pneg %p40
        %p207 = pneg %p37
        %p208 = pneg %p61
        %p209 = pneg %p58
        %p210 = pneg %p82
        %p211 = pneg %p79
        %p212 = pneg %p103
        %p213 = pneg %p100
        %p214 = pneg %p129
        %p215 = pneg %p126
        %s216 = sand.u32 %s116, 1
        %s217 = scalar_lea.sflag [#allocation4], %s216
        %s218 = sand.u32 %s116, 1
        %s219 = smul.addr %s218, 128
        %s220 = scalar_lea.vmem [#allocation5], %s219
        %s221 = smul.u32 16, %s19
        %s222 = ssub.s32 24, %s221
        %p223 = scmp.lt.s32.totalorder %s222, 16
        %s224 = scalar_select %p223, %s222, 16
        %s225 = smul.u32 4, %s224
        %p226 = scmp.lt.s32.totalorder %s221, 23
        %s227 = scalar_select %p226, %s221, 23
        %s228 = smul.addr %s227, 4
        %s229 = scalar_lea.vmem %s0, %s228
        %s230 = smul.u32 16, %s19
        %s231 = ssub.s32 24, %s230
        %p232 = scmp.lt.s32.totalorder %s231, 16
        %s233 = scalar_select %p232, %s231, 16
        %s234 = smul.u32 4, %s233
        %s235 = smul.u32 16, %s19
        %s236 = ssub.s32 24, %s235
        %p237 = scmp.lt.s32.totalorder %s236, 16
        %s238 = scalar_select %p237, %s236, 16
        %s239 = smul.u32 8, %s238
        %v240 = vld [vmem:[%s229] sm:$0xf]
        %v241 = vld [vmem:[%s229 + $0x4] sm:$0xf]
        %v242 = vld [vmem:[%s229 + $0x8] sm:$0xf]
        %v243 = vld [vmem:[%s229 + $0xc] sm:$0xf]
        %v244 = vld [vmem:[%s229 + $0x10] sm:$0xf]
        %v245 = vld [vmem:[%s229 + $0x14] sm:$0xf]
        %v246 = vld [vmem:[%s229 + $0x18] sm:$0xf]
        %v247 = vld [vmem:[%s229 + $0x1c] sm:$0xf]
        %v248 = vld [vmem:[%s229 + $0x20] sm:$0xf]
        %v249 = vld [vmem:[%s229 + $0x24] sm:$0xf]
        %v250 = vld [vmem:[%s229 + $0x28] sm:$0xf]
        %v251 = vld [vmem:[%s229 + $0x2c] sm:$0xf]
        %v252 = vld [vmem:[%s229 + $0x30] sm:$0xf]
        %v253 = vld [vmem:[%s229 + $0x34] sm:$0xf]
        %v254 = vld [vmem:[%s229 + $0x38] sm:$0xf]
        %v255 = vld [vmem:[%s229 + $0x3c] sm:$0xf]
        %v256 = vunpack.c.l.bf16 %v240
        %v257 = vunpack.c.l.bf16 %v241
        %v258 = vunpack.c.l.bf16 %v242
        %v259 = vunpack.c.l.bf16 %v243
        %v260 = vunpack.c.l.bf16 %v244
        %v261 = vunpack.c.l.bf16 %v245
        %v262 = vunpack.c.l.bf16 %v246
        %v263 = vunpack.c.l.bf16 %v247
        %v264 = vunpack.c.l.bf16 %v248
        %v265 = vunpack.c.l.bf16 %v249
        %v266 = vunpack.c.l.bf16 %v250
        %v267 = vunpack.c.l.bf16 %v251
        %v268 = vunpack.c.l.bf16 %v252
        %v269 = vunpack.c.l.bf16 %v253
        %v270 = vunpack.c.l.bf16 %v254
        %v271 = vunpack.c.l.bf16 %v255
        %272 = vadd.xlane.f32.xlu0 %v256
        %v273 = vpop.xlane.xlu0 %272
        %274 = vadd.xlane.f32.xlu0 %v257
        %v275 = vpop.xlane.xlu0 %274
        %276 = vadd.xlane.f32.xlu0 %v258
        %v277 = vpop.xlane.xlu0 %276
        %278 = vadd.xlane.f32.xlu0 %v259
        %v279 = vpop.xlane.xlu0 %278
        %280 = vadd.xlane.f32.xlu0 %v260
        %v281 = vpop.xlane.xlu0 %280
        %282 = vadd.xlane.f32.xlu0 %v261
        %v283 = vpop.xlane.xlu0 %282
        %284 = vadd.xlane.f32.xlu0 %v262
        %v285 = vpop.xlane.xlu0 %284
        %286 = vadd.xlane.f32.xlu0 %v263
        %v287 = vpop.xlane.xlu0 %286
        %288 = vadd.xlane.f32.xlu0 %v264
        %v289 = vpop.xlane.xlu0 %288
        %290 = vadd.xlane.f32.xlu0 %v265
        %v291 = vpop.xlane.xlu0 %290
        %292 = vadd.xlane.f32.xlu0 %v266
        %v293 = vpop.xlane.xlu0 %292
        %294 = vadd.xlane.f32.xlu0 %v267
        %v295 = vpop.xlane.xlu0 %294
        %296 = vadd.xlane.f32.xlu0 %v268
        %v297 = vpop.xlane.xlu0 %296
        %298 = vadd.xlane.f32.xlu0 %v269
        %v299 = vpop.xlane.xlu0 %298
        %300 = vadd.xlane.f32.xlu0 %v270
        %v301 = vpop.xlane.xlu0 %300
        %302 = vadd.xlane.f32.xlu0 %v271
        %v303 = vpop.xlane.xlu0 %302
        %v304 = vrcp.pop 128.0
        %v305 = vmul.f32 128.0, %v304
        %v306 = vsub.f32 1.0, %v305
        %v307 = vmul.f32 %v304, %v306
        %v308 = vadd.f32 %v304, %v307
        %vm309 = vweird.f32 %v304
        %v310 = vsel %vm309, %v304, %v308
        %v311 = vmul.f32 %v273, %v310
        %v312 = vmul.f32 %v275, %v310
        %v313 = vmul.f32 %v277, %v310
        %v314 = vmul.f32 %v279, %v310
        %v315 = vmul.f32 %v281, %v310
        %v316 = vmul.f32 %v283, %v310
        %v317 = vmul.f32 %v285, %v310
        %v318 = vmul.f32 %v287, %v310
        %v319 = vmul.f32 %v289, %v310
        %v320 = vmul.f32 %v291, %v310
        %v321 = vmul.f32 %v293, %v310
        %v322 = vmul.f32 %v295, %v310
        %v323 = vmul.f32 %v297, %v310
        %v324 = vmul.f32 %v299, %v310
        %v325 = vmul.f32 %v301, %v310
        %v326 = vmul.f32 %v303, %v310
        %v327 = vsub.f32 %v256, %v311
        %v328 = vsub.f32 %v257, %v312
        %v329 = vsub.f32 %v258, %v313
        %v330 = vsub.f32 %v259, %v314
        %v331 = vsub.f32 %v260, %v315
        %v332 = vsub.f32 %v261, %v316
        %v333 = vsub.f32 %v262, %v317
        %v334 = vsub.f32 %v263, %v318
        %v335 = vsub.f32 %v264, %v319
        %v336 = vsub.f32 %v265, %v320
        %v337 = vsub.f32 %v266, %v321
        %v338 = vsub.f32 %v267, %v322
        %v339 = vsub.f32 %v268, %v323
        %v340 = vsub.f32 %v269, %v324
        %v341 = vsub.f32 %v270, %v325
        %v342 = vsub.f32 %v271, %v326
        %v343 = vmul.f32 %v327, %v327
        %v344 = vmul.f32 %v328, %v328
        %v345 = vmul.f32 %v329, %v329
        %v346 = vmul.f32 %v330, %v330
        %v347 = vmul.f32 %v331, %v331
        %v348 = vmul.f32 %v332, %v332
        %v349 = vmul.f32 %v333, %v333
        %v350 = vmul.f32 %v334, %v334
        %v351 = vmul.f32 %v335, %v335
        %v352 = vmul.f32 %v336, %v336
        %v353 = vmul.f32 %v337, %v337
        %v354 = vmul.f32 %v338, %v338
        %v355 = vmul.f32 %v339, %v339
        %v356 = vmul.f32 %v340, %v340
        %v357 = vmul.f32 %v341, %v341
        %v358 = vmul.f32 %v342, %v342
        %359 = vadd.xlane.f32.xlu0 %v343
        %v360 = vpop.xlane.xlu0 %359
        %361 = vadd.xlane.f32.xlu0 %v344
        %v362 = vpop.xlane.xlu0 %361
        %363 = vadd.xlane.f32.xlu0 %v345
        %v364 = vpop.xlane.xlu0 %363
        %365 = vadd.xlane.f32.xlu0 %v346
        %v366 = vpop.xlane.xlu0 %365
        %367 = vadd.xlane.f32.xlu0 %v347
        %v368 = vpop.xlane.xlu0 %367
        %369 = vadd.xlane.f32.xlu0 %v348
        %v370 = vpop.xlane.xlu0 %369
        %371 = vadd.xlane.f32.xlu0 %v349
        %v372 = vpop.xlane.xlu0 %371
        %373 = vadd.xlane.f32.xlu0 %v350
        %v374 = vpop.xlane.xlu0 %373
        %375 = vadd.xlane.f32.xlu0 %v351
        %v376 = vpop.xlane.xlu0 %375
        %377 = vadd.xlane.f32.xlu0 %v352
        %v378 = vpop.xlane.xlu0 %377
        %379 = vadd.xlane.f32.xlu0 %v353
        %v380 = vpop.xlane.xlu0 %379
        %381 = vadd.xlane.f32.xlu0 %v354
        %v382 = vpop.xlane.xlu0 %381
        %383 = vadd.xlane.f32.xlu0 %v355
        %v384 = vpop.xlane.xlu0 %383
        %385 = vadd.xlane.f32.xlu0 %v356
        %v386 = vpop.xlane.xlu0 %385
        %387 = vadd.xlane.f32.xlu0 %v357
        %v388 = vpop.xlane.xlu0 %387
        %389 = vadd.xlane.f32.xlu0 %v358
        %v390 = vpop.xlane.xlu0 %389
        %v391 = vmul.f32 %v360, %v310
        %v392 = vmul.f32 %v362, %v310
        %v393 = vmul.f32 %v364, %v310
        %v394 = vmul.f32 %v366, %v310
        %v395 = vmul.f32 %v368, %v310
        %v396 = vmul.f32 %v370, %v310
        %v397 = vmul.f32 %v372, %v310
        %v398 = vmul.f32 %v374, %v310
        %v399 = vmul.f32 %v376, %v310
        %v400 = vmul.f32 %v378, %v310
        %v401 = vmul.f32 %v380, %v310
        %v402 = vmul.f32 %v382, %v310
        %v403 = vmul.f32 %v384, %v310
        %v404 = vmul.f32 %v386, %v310
        %v405 = vmul.f32 %v388, %v310
        %v406 = vmul.f32 %v390, %v310
        %v407 = vadd.f32 %v391, 1e-05
        %v408 = vadd.f32 %v392, 1e-05
        %v409 = vadd.f32 %v393, 1e-05
        %v410 = vadd.f32 %v394, 1e-05
        %v411 = vadd.f32 %v395, 1e-05
        %v412 = vadd.f32 %v396, 1e-05
        %v413 = vadd.f32 %v397, 1e-05
        %v414 = vadd.f32 %v398, 1e-05
        %v415 = vadd.f32 %v399, 1e-05
        %v416 = vadd.f32 %v400, 1e-05
        %v417 = vadd.f32 %v401, 1e-05
        %v418 = vadd.f32 %v402, 1e-05
        %v419 = vadd.f32 %v403, 1e-05
        %v420 = vadd.f32 %v404, 1e-05
        %v421 = vadd.f32 %v405, 1e-05
        %v422 = vadd.f32 %v406, 1e-05
        %v423 = vrsqrt.pop %v407
        %v424 = vmul.f32 %v423, %v407
        %v425 = vmul.f32 %v424, %v423
        %v426 = vmul.f32 0.5, %v425
        %v427 = vsub.f32 1.5, %v426
        %v428 = vmul.f32 %v423, %v427
        %vm429 = vweird.f32 %v407
        %vm430 = vweird.f32 %v423
        %vm431 = vmor %vm429, %vm430
        %v432 = vsel %vm431, %v423, %v428
        %v433 = vrsqrt.pop %v408
        %v434 = vmul.f32 %v433, %v408
        %v435 = vmul.f32 %v434, %v433
        %v436 = vmul.f32 0.5, %v435
        %v437 = vsub.f32 1.5, %v436
        %v438 = vmul.f32 %v433, %v437
        %vm439 = vweird.f32 %v408
        %vm440 = vweird.f32 %v433
        %vm441 = vmor %vm439, %vm440
        %v442 = vsel %vm441, %v433, %v438
        %v443 = vrsqrt.pop %v409
        %v444 = vmul.f32 %v443, %v409
        %v445 = vmul.f32 %v444, %v443
        %v446 = vmul.f32 0.5, %v445
        %v447 = vsub.f32 1.5, %v446
        %v448 = vmul.f32 %v443, %v447
        %vm449 = vweird.f32 %v409
        %vm450 = vweird.f32 %v443
        %vm451 = vmor %vm449, %vm450
        %v452 = vsel %vm451, %v443, %v448
        %v453 = vrsqrt.pop %v410
        %v454 = vmul.f32 %v453, %v410
        %v455 = vmul.f32 %v454, %v453
        %v456 = vmul.f32 0.5, %v455
        %v457 = vsub.f32 1.5, %v456
        %v458 = vmul.f32 %v453, %v457
        %vm459 = vweird.f32 %v410
        %vm460 = vweird.f32 %v453
        %vm461 = vmor %vm459, %vm460
        %v462 = vsel %vm461, %v453, %v458
        %v463 = vrsqrt.pop %v411
        %v464 = vmul.f32 %v463, %v411
        %v465 = vmul.f32 %v464, %v463
        %v466 = vmul.f32 0.5, %v465
        %v467 = vsub.f32 1.5, %v466
        %v468 = vmul.f32 %v463, %v467
        %vm469 = vweird.f32 %v411
        %vm470 = vweird.f32 %v463
        %vm471 = vmor %vm469, %vm470
        %v472 = vsel %vm471, %v463, %v468
        %v473 = vrsqrt.pop %v412
        %v474 = vmul.f32 %v473, %v412
        %v475 = vmul.f32 %v474, %v473
        %v476 = vmul.f32 0.5, %v475
        %v477 = vsub.f32 1.5, %v476
        %v478 = vmul.f32 %v473, %v477
        %vm479 = vweird.f32 %v412
        %vm480 = vweird.f32 %v473
        %vm481 = vmor %vm479, %vm480
        %v482 = vsel %vm481, %v473, %v478
        %v483 = vrsqrt.pop %v413
        %v484 = vmul.f32 %v483, %v413
        %v485 = vmul.f32 %v484, %v483
        %v486 = vmul.f32 0.5, %v485
        %v487 = vsub.f32 1.5, %v486
        %v488 = vmul.f32 %v483, %v487
        %vm489 = vweird.f32 %v413
        %vm490 = vweird.f32 %v483
        %vm491 = vmor %vm489, %vm490
        %v492 = vsel %vm491, %v483, %v488
        %v493 = vrsqrt.pop %v414
        %v494 = vmul.f32 %v493, %v414
        %v495 = vmul.f32 %v494, %v493
        %v496 = vmul.f32 0.5, %v495
        %v497 = vsub.f32 1.5, %v496
        %v498 = vmul.f32 %v493, %v497
        %vm499 = vweird.f32 %v414
        %vm500 = vweird.f32 %v493
        %vm501 = vmor %vm499, %vm500
        %v502 = vsel %vm501, %v493, %v498
        %v503 = vrsqrt.pop %v415
        %v504 = vmul.f32 %v503, %v415
        %v505 = vmul.f32 %v504, %v503
        %v506 = vmul.f32 0.5, %v505
        %v507 = vsub.f32 1.5, %v506
        %v508 = vmul.f32 %v503, %v507
        %vm509 = vweird.f32 %v415
        %vm510 = vweird.f32 %v503
        %vm511 = vmor %vm509, %vm510
        %v512 = vsel %vm511, %v503, %v508
        %v513 = vrsqrt.pop %v416
        %v514 = vmul.f32 %v513, %v416
        %v515 = vmul.f32 %v514, %v513
        %v516 = vmul.f32 0.5, %v515
        %v517 = vsub.f32 1.5, %v516
        %v518 = vmul.f32 %v513, %v517
        %vm519 = vweird.f32 %v416
        %vm520 = vweird.f32 %v513
        %vm521 = vmor %vm519, %vm520
        %v522 = vsel %vm521, %v513, %v518
        %v523 = vrsqrt.pop %v417
        %v524 = vmul.f32 %v523, %v417
        %v525 = vmul.f32 %v524, %v523
        %v526 = vmul.f32 0.5, %v525
        %v527 = vsub.f32 1.5, %v526
        %v528 = vmul.f32 %v523, %v527
        %vm529 = vweird.f32 %v417
        %vm530 = vweird.f32 %v523
        %vm531 = vmor %vm529, %vm530
        %v532 = vsel %vm531, %v523, %v528
        %v533 = vrsqrt.pop %v418
        %v534 = vmul.f32 %v533, %v418
        %v535 = vmul.f32 %v534, %v533
        %v536 = vmul.f32 0.5, %v535
        %v537 = vsub.f32 1.5, %v536
        %v538 = vmul.f32 %v533, %v537
        %vm539 = vweird.f32 %v418
        %vm540 = vweird.f32 %v533
        %vm541 = vmor %vm539, %vm540
        %v542 = vsel %vm541, %v533, %v538
        %v543 = vrsqrt.pop %v419
        %v544 = vmul.f32 %v543, %v419
        %v545 = vmul.f32 %v544, %v543
        %v546 = vmul.f32 0.5, %v545
        %v547 = vsub.f32 1.5, %v546
        %v548 = vmul.f32 %v543, %v547
        %vm549 = vweird.f32 %v419
        %vm550 = vweird.f32 %v543
        %vm551 = vmor %vm549, %vm550
        %v552 = vsel %vm551, %v543, %v548
        %v553 = vrsqrt.pop %v420
        %v554 = vmul.f32 %v553, %v420
        %v555 = vmul.f32 %v554, %v553
        %v556 = vmul.f32 0.5, %v555
        %v557 = vsub.f32 1.5, %v556
        %v558 = vmul.f32 %v553, %v557
        %vm559 = vweird.f32 %v420
        %vm560 = vweird.f32 %v553
        %vm561 = vmor %vm559, %vm560
        %v562 = vsel %vm561, %v553, %v558
        %v563 = vrsqrt.pop %v421
        %v564 = vmul.f32 %v563, %v421
        %v565 = vmul.f32 %v564, %v563
        %v566 = vmul.f32 0.5, %v565
        %v567 = vsub.f32 1.5, %v566
        %v568 = vmul.f32 %v563, %v567
        %vm569 = vweird.f32 %v421
        %vm570 = vweird.f32 %v563
        %vm571 = vmor %vm569, %vm570
        %v572 = vsel %vm571, %v563, %v568
        %v573 = vrsqrt.pop %v422
        %v574 = vmul.f32 %v573, %v422
        %v575 = vmul.f32 %v574, %v573
        %v576 = vmul.f32 0.5, %v575
        %v577 = vsub.f32 1.5, %v576
        %v578 = vmul.f32 %v573, %v577
        %vm579 = vweird.f32 %v422
        %vm580 = vweird.f32 %v573
        %vm581 = vmor %vm579, %vm580
        %v582 = vsel %vm581, %v573, %v578
        %v583 = vmul.f32 %v327, %v432
        %v584 = vmul.f32 %v328, %v442
        %v585 = vmul.f32 %v329, %v452
        %v586 = vmul.f32 %v330, %v462
        %v587 = vmul.f32 %v331, %v472
        %v588 = vmul.f32 %v332, %v482
        %v589 = vmul.f32 %v333, %v492
        %v590 = vmul.f32 %v334, %v502
        %v591 = vmul.f32 %v335, %v512
        %v592 = vmul.f32 %v336, %v522
        %v593 = vmul.f32 %v337, %v532
        %v594 = vmul.f32 %v338, %v542
        %v595 = vmul.f32 %v339, %v552
        %v596 = vmul.f32 %v340, %v562
        %v597 = vmul.f32 %v341, %v572
        %v598 = vmul.f32 %v342, %v582
        %v599 = vpack.c.bf16 %v584, %v583
        %v600 = vpack.c.bf16 %v586, %v585
        %v601 = vpack.c.bf16 %v588, %v587
        %v602 = vpack.c.bf16 %v590, %v589
        %v603 = vpack.c.bf16 %v592, %v591
        %v604 = vpack.c.bf16 %v594, %v593
        %v605 = vpack.c.bf16 %v596, %v595
        %v606 = vpack.c.bf16 %v598, %v597
        %v607 = vld [vmem:[%s1] sm:$0xff]
        %v608 = vld [vmem:[%s1 + $0x8] sm:$0xff]
        %v609 = vld [vmem:[%s1 + $0x10] sm:$0xff]
        %v610 = vld [vmem:[%s1 + $0x18] sm:$0xff]
        %v611 = vld [vmem:[%s1 + $0x20] sm:$0xff]
        %v612 = vld [vmem:[%s1 + $0x28] sm:$0xff]
        %v613 = vld [vmem:[%s1 + $0x30] sm:$0xff]
        %v614 = vld [vmem:[%s1 + $0x38] sm:$0xff]
        %v615 = vld [vmem:[%s1 + $0x40] sm:$0xff]
        %v616 = vld [vmem:[%s1 + $0x48] sm:$0xff]
        %v617 = vld [vmem:[%s1 + $0x50] sm:$0xff]
        %v618 = vld [vmem:[%s1 + $0x58] sm:$0xff]
        %v619 = vld [vmem:[%s1 + $0x60] sm:$0xff]
        %v620 = vld [vmem:[%s1 + $0x68] sm:$0xff]
        %v621 = vld [vmem:[%s1 + $0x70] sm:$0xff]
        %v622 = vld [vmem:[%s1 + $0x78] sm:$0xff]
        %v623 = vld [vmem:[%s1 + $0x80] sm:$0xff]
        %v624 = vld [vmem:[%s1 + $0x88] sm:$0xff]
        %v625 = vld [vmem:[%s1 + $0x90] sm:$0xff]
        %v626 = vld [vmem:[%s1 + $0x98] sm:$0xff]
        %v627 = vld [vmem:[%s1 + $0xa0] sm:$0xff]
        %v628 = vld [vmem:[%s1 + $0xa8] sm:$0xff]
        %v629 = vld [vmem:[%s1 + $0xb0] sm:$0xff]
        %v630 = vld [vmem:[%s1 + $0xb8] sm:$0xff]
        %v631 = vld [vmem:[%s1 + $0xc0] sm:$0xff]
        %v632 = vld [vmem:[%s1 + $0xc8] sm:$0xff]
        %v633 = vld [vmem:[%s1 + $0xd0] sm:$0xff]
        %v634 = vld [vmem:[%s1 + $0xd8] sm:$0xff]
        %v635 = vld [vmem:[%s1 + $0xe0] sm:$0xff]
        %v636 = vld [vmem:[%s1 + $0xe8] sm:$0xff]
        %v637 = vld [vmem:[%s1 + $0xf0] sm:$0xff]
        %v638 = vld [vmem:[%s1 + $0xf8] sm:$0xff]
        %v639 = vld [vmem:[%s3] sm:$0xf]
        %v641 = vperm.slane %v639, 0
        %v642 = vperm.slane %v639, 1
        %v643 = vperm.slane %v639, 2
        %v644 = vperm.slane %v639, 3
        %v681 = vunpack.c.l.b16 %v607
        %v682 = vunpack.c.h.b16 %v607
        %v683 = vunpack.c.l.b16 %v608
        %v684 = vunpack.c.h.b16 %v608
        %v685 = vunpack.c.l.b16 %v609
        %v686 = vunpack.c.h.b16 %v609
        %v687 = vunpack.c.l.b16 %v610
        %v688 = vunpack.c.h.b16 %v610
        %v689 = vunpack.c.l.b16 %v611
        %v690 = vunpack.c.h.b16 %v611
        %v691 = vunpack.c.l.b16 %v612
        %v692 = vunpack.c.h.b16 %v612
        %v693 = vunpack.c.l.b16 %v613
        %v694 = vunpack.c.h.b16 %v613
        %v695 = vunpack.c.l.b16 %v614
        %v696 = vunpack.c.h.b16 %v614
        %v697 = vunpack.c.l.b16 %v615
        %v698 = vunpack.c.h.b16 %v615
        %v699 = vunpack.c.l.b16 %v616
        %v700 = vunpack.c.h.b16 %v616
        %v701 = vunpack.c.l.b16 %v617
        %v702 = vunpack.c.h.b16 %v617
        %v703 = vunpack.c.l.b16 %v618
        %v704 = vunpack.c.h.b16 %v618
        %v705 = vunpack.c.l.b16 %v619
        %v706 = vunpack.c.h.b16 %v619
        %v707 = vunpack.c.l.b16 %v620
        %v708 = vunpack.c.h.b16 %v620
        %v709 = vunpack.c.l.b16 %v621
        %v710 = vunpack.c.h.b16 %v621
        %v711 = vunpack.c.l.b16 %v622
        %v712 = vunpack.c.h.b16 %v622
        %v713 = vunpack.c.l.b16 %v623
        %v714 = vunpack.c.h.b16 %v623
        %v715 = vunpack.c.l.b16 %v624
        %v716 = vunpack.c.h.b16 %v624
        %v717 = vunpack.c.l.b16 %v625
        %v718 = vunpack.c.h.b16 %v625
        %v719 = vunpack.c.l.b16 %v626
        %v720 = vunpack.c.h.b16 %v626
        %v721 = vunpack.c.l.b16 %v627
        %v722 = vunpack.c.h.b16 %v627
        %v723 = vunpack.c.l.b16 %v628
        %v724 = vunpack.c.h.b16 %v628
        %v725 = vunpack.c.l.b16 %v629
        %v726 = vunpack.c.h.b16 %v629
        %v727 = vunpack.c.l.b16 %v630
        %v728 = vunpack.c.h.b16 %v630
        %v729 = vunpack.c.l.b16 %v631
        %v730 = vunpack.c.h.b16 %v631
        %v731 = vunpack.c.l.b16 %v632
        %v732 = vunpack.c.h.b16 %v632
        %v733 = vunpack.c.l.b16 %v633
        %v734 = vunpack.c.h.b16 %v633
        %v735 = vunpack.c.l.b16 %v634
        %v736 = vunpack.c.h.b16 %v634
        %v737 = vunpack.c.l.b16 %v635
        %v738 = vunpack.c.h.b16 %v635
        %v739 = vunpack.c.l.b16 %v636
        %v740 = vunpack.c.h.b16 %v636
        %v741 = vunpack.c.l.b16 %v637
        %v742 = vunpack.c.h.b16 %v637
        %v743 = vunpack.c.l.b16 %v638
        %v744 = vunpack.c.h.b16 %v638
        %v745 = vpack.c.b16 %v685, %v681
        %v746 = vpack.c.b16 %v686, %v682
        %v747 = vpack.c.b16 %v687, %v683
        %v748 = vpack.c.b16 %v688, %v684
        %v749 = vpack.c.b16 %v693, %v689
        %v750 = vpack.c.b16 %v694, %v690
        %v751 = vpack.c.b16 %v695, %v691
        %v752 = vpack.c.b16 %v696, %v692
        %v753 = vpack.c.b16 %v701, %v697
        %v754 = vpack.c.b16 %v702, %v698
        %v755 = vpack.c.b16 %v703, %v699
        %v756 = vpack.c.b16 %v704, %v700
        %v757 = vpack.c.b16 %v709, %v705
        %v758 = vpack.c.b16 %v710, %v706
        %v759 = vpack.c.b16 %v711, %v707
        %v760 = vpack.c.b16 %v712, %v708
        %v761 = vpack.c.b16 %v717, %v713
        %v762 = vpack.c.b16 %v718, %v714
        %v763 = vpack.c.b16 %v719, %v715
        %v764 = vpack.c.b16 %v720, %v716
        %v765 = vpack.c.b16 %v725, %v721
        %v766 = vpack.c.b16 %v726, %v722
        %v767 = vpack.c.b16 %v727, %v723
        %v768 = vpack.c.b16 %v728, %v724
        %v769 = vpack.c.b16 %v733, %v729
        %v770 = vpack.c.b16 %v734, %v730
        %v771 = vpack.c.b16 %v735, %v731
        %v772 = vpack.c.b16 %v736, %v732
        %v773 = vpack.c.b16 %v741, %v737
        %v774 = vpack.c.b16 %v742, %v738
        %v775 = vpack.c.b16 %v743, %v739
        %v776 = vpack.c.b16 %v744, %v740
        %809 = vmatpush.bf16.msra.mxu0 %v773
        %810 = vmatpush.bf16.msra.mxu0 %v769
        %811 = vmatpush.bf16.msra.mxu0 %v765
        %812 = vmatpush.bf16.msra.mxu0 %v761
        %813 = vmatpush.bf16.msra.mxu0 %v757
        %814 = vmatpush.bf16.msra.mxu0 %v753
        %815 = vmatpush.bf16.msra.mxu0 %v749
        %816 = vmatpush.bf16.msra.mxu0 %v745
        %817 = vmatmul.bf16.gmra.mxu0 %v599
        %v818 = vpop.f32.mrf.mxu0
        %v819 = vadd.f32 %v641, %v818
        %v820 = vpop.f32.mrf.mxu0
        %v821 = vadd.f32 %v641, %v820
        %822 = vmatmul.bf16.gmra.mxu0 %v600
        %v823 = vpop.f32.mrf.mxu0
        %v824 = vadd.f32 %v641, %v823
        %v825 = vpop.f32.mrf.mxu0
        %v826 = vadd.f32 %v641, %v825
        %827 = vmatmul.bf16.gmra.mxu0 %v601
        %v828 = vpop.f32.mrf.mxu0
        %v829 = vadd.f32 %v641, %v828
        %v830 = vpop.f32.mrf.mxu0
        %v831 = vadd.f32 %v641, %v830
        %832 = vmatmul.bf16.gmra.mxu0 %v602
        %v833 = vpop.f32.mrf.mxu0
        %v834 = vadd.f32 %v641, %v833
        %v835 = vpop.f32.mrf.mxu0
        %v836 = vadd.f32 %v641, %v835
        %837 = vmatmul.bf16.gmra.mxu0 %v603
        %v838 = vpop.f32.mrf.mxu0
        %v839 = vadd.f32 %v641, %v838
        %v840 = vpop.f32.mrf.mxu0
        %v841 = vadd.f32 %v641, %v840
        %842 = vmatmul.bf16.gmra.mxu0 %v604
        %v843 = vpop.f32.mrf.mxu0
        %v844 = vadd.f32 %v641, %v843
        %v845 = vpop.f32.mrf.mxu0
        %v846 = vadd.f32 %v641, %v845
        %847 = vmatmul.bf16.gmra.mxu0 %v605
        %v848 = vpop.f32.mrf.mxu0
        %v849 = vadd.f32 %v641, %v848
        %v850 = vpop.f32.mrf.mxu0
        %v851 = vadd.f32 %v641, %v850
        %852 = vmatmul.bf16.gmra.mxu0 %v606
        %v853 = vpop.f32.mrf.mxu0
        %v854 = vadd.f32 %v641, %v853
        %v855 = vpop.f32.mrf.mxu0
        %v856 = vadd.f32 %v641, %v855
        %857 = vdwg.mxu0
        %858 = vmatpush.bf16.msra.mxu0 %v774
        %859 = vmatpush.bf16.msra.mxu0 %v770
        %860 = vmatpush.bf16.msra.mxu0 %v766
        %861 = vmatpush.bf16.msra.mxu0 %v762
        %862 = vmatpush.bf16.msra.mxu0 %v758
        %863 = vmatpush.bf16.msra.mxu0 %v754
        %864 = vmatpush.bf16.msra.mxu0 %v750
        %865 = vmatpush.bf16.msra.mxu0 %v746
        %866 = vmatmul.bf16.gmra.mxu0 %v599
        %v867 = vpop.f32.mrf.mxu0
        %v868 = vadd.f32 %v642, %v867
        %v869 = vpop.f32.mrf.mxu0
        %v870 = vadd.f32 %v642, %v869
        %871 = vmatmul.bf16.gmra.mxu0 %v600
        %v872 = vpop.f32.mrf.mxu0
        %v873 = vadd.f32 %v642, %v872
        %v874 = vpop.f32.mrf.mxu0
        %v875 = vadd.f32 %v642, %v874
        %876 = vmatmul.bf16.gmra.mxu0 %v601
        %v877 = vpop.f32.mrf.mxu0
        %v878 = vadd.f32 %v642, %v877
        %v879 = vpop.f32.mrf.mxu0
        %v880 = vadd.f32 %v642, %v879
        %881 = vmatmul.bf16.gmra.mxu0 %v602
        %v882 = vpop.f32.mrf.mxu0
        %v883 = vadd.f32 %v642, %v882
        %v884 = vpop.f32.mrf.mxu0
        %v885 = vadd.f32 %v642, %v884
        %886 = vmatmul.bf16.gmra.mxu0 %v603
        %v887 = vpop.f32.mrf.mxu0
        %v888 = vadd.f32 %v642, %v887
        %v889 = vpop.f32.mrf.mxu0
        %v890 = vadd.f32 %v642, %v889
        %891 = vmatmul.bf16.gmra.mxu0 %v604
        %v892 = vpop.f32.mrf.mxu0
        %v893 = vadd.f32 %v642, %v892
        %v894 = vpop.f32.mrf.mxu0
        %v895 = vadd.f32 %v642, %v894
        %896 = vmatmul.bf16.gmra.mxu0 %v605
        %v897 = vpop.f32.mrf.mxu0
        %v898 = vadd.f32 %v642, %v897
        %v899 = vpop.f32.mrf.mxu0
        %v900 = vadd.f32 %v642, %v899
        %901 = vmatmul.bf16.gmra.mxu0 %v606
        %v902 = vpop.f32.mrf.mxu0
        %v903 = vadd.f32 %v642, %v902
        %v904 = vpop.f32.mrf.mxu0
        %v905 = vadd.f32 %v642, %v904
        %906 = vdwg.mxu0
        %907 = vmatpush.bf16.msra.mxu0 %v775
        %908 = vmatpush.bf16.msra.mxu0 %v771
        %909 = vmatpush.bf16.msra.mxu0 %v767
        %910 = vmatpush.bf16.msra.mxu0 %v763
        %911 = vmatpush.bf16.msra.mxu0 %v759
        %912 = vmatpush.bf16.msra.mxu0 %v755
        %913 = vmatpush.bf16.msra.mxu0 %v751
        %914 = vmatpush.bf16.msra.mxu0 %v747
        %915 = vmatmul.bf16.gmra.mxu0 %v599
        %v916 = vpop.f32.mrf.mxu0
        %v917 = vadd.f32 %v643, %v916
        %v918 = vpop.f32.mrf.mxu0
        %v919 = vadd.f32 %v643, %v918
        %920 = vmatmul.bf16.gmra.mxu0 %v600
        %v921 = vpop.f32.mrf.mxu0
        %v922 = vadd.f32 %v643, %v921
        %v923 = vpop.f32.mrf.mxu0
        %v924 = vadd.f32 %v643, %v923
        %925 = vmatmul.bf16.gmra.mxu0 %v601
        %v926 = vpop.f32.mrf.mxu0
        %v927 = vadd.f32 %v643, %v926
        %v928 = vpop.f32.mrf.mxu0
        %v929 = vadd.f32 %v643, %v928
        %930 = vmatmul.bf16.gmra.mxu0 %v602
        %v931 = vpop.f32.mrf.mxu0
        %v932 = vadd.f32 %v643, %v931
        %v933 = vpop.f32.mrf.mxu0
        %v934 = vadd.f32 %v643, %v933
        %935 = vmatmul.bf16.gmra.mxu0 %v603
        %v936 = vpop.f32.mrf.mxu0
        %v937 = vadd.f32 %v643, %v936
        %v938 = vpop.f32.mrf.mxu0
        %v939 = vadd.f32 %v643, %v938
        %940 = vmatmul.bf16.gmra.mxu0 %v604
        %v941 = vpop.f32.mrf.mxu0
        %v942 = vadd.f32 %v643, %v941
        %v943 = vpop.f32.mrf.mxu0
        %v944 = vadd.f32 %v643, %v943
        %945 = vmatmul.bf16.gmra.mxu0 %v605
        %v946 = vpop.f32.mrf.mxu0
        %v947 = vadd.f32 %v643, %v946
        %v948 = vpop.f32.mrf.mxu0
        %v949 = vadd.f32 %v643, %v948
        %950 = vmatmul.bf16.gmra.mxu0 %v606
        %v951 = vpop.f32.mrf.mxu0
        %v952 = vadd.f32 %v643, %v951
        %v953 = vpop.f32.mrf.mxu0
        %v954 = vadd.f32 %v643, %v953
        %955 = vdwg.mxu0
        %956 = vmatpush.bf16.msra.mxu0 %v776
        %957 = vmatpush.bf16.msra.mxu0 %v772
        %958 = vmatpush.bf16.msra.mxu0 %v768
        %959 = vmatpush.bf16.msra.mxu0 %v764
        %960 = vmatpush.bf16.msra.mxu0 %v760
        %961 = vmatpush.bf16.msra.mxu0 %v756
        %962 = vmatpush.bf16.msra.mxu0 %v752
        %963 = vmatpush.bf16.msra.mxu0 %v748
        %964 = vmatmul.bf16.gmra.mxu0 %v599
        %v965 = vpop.f32.mrf.mxu0
        %v966 = vadd.f32 %v644, %v965
        %v967 = vpop.f32.mrf.mxu0
        %v968 = vadd.f32 %v644, %v967
        %969 = vmatmul.bf16.gmra.mxu0 %v600
        %v970 = vpop.f32.mrf.mxu0
        %v971 = vadd.f32 %v644, %v970
        %v972 = vpop.f32.mrf.mxu0
        %v973 = vadd.f32 %v644, %v972
        %974 = vmatmul.bf16.gmra.mxu0 %v601
        %v975 = vpop.f32.mrf.mxu0
        %v976 = vadd.f32 %v644, %v975
        %v977 = vpop.f32.mrf.mxu0
        %v978 = vadd.f32 %v644, %v977
        %979 = vmatmul.bf16.gmra.mxu0 %v602
        %v980 = vpop.f32.mrf.mxu0
        %v981 = vadd.f32 %v644, %v980
        %v982 = vpop.f32.mrf.mxu0
        %v983 = vadd.f32 %v644, %v982
        %984 = vmatmul.bf16.gmra.mxu0 %v603
        %v985 = vpop.f32.mrf.mxu0
        %v986 = vadd.f32 %v644, %v985
        %v987 = vpop.f32.mrf.mxu0
        %v988 = vadd.f32 %v644, %v987
        %989 = vmatmul.bf16.gmra.mxu0 %v604
        %v990 = vpop.f32.mrf.mxu0
        %v991 = vadd.f32 %v644, %v990
        %v992 = vpop.f32.mrf.mxu0
        %v993 = vadd.f32 %v644, %v992
        %994 = vmatmul.bf16.gmra.mxu0 %v605
        %v995 = vpop.f32.mrf.mxu0
        %v996 = vadd.f32 %v644, %v995
        %v997 = vpop.f32.mrf.mxu0
        %v998 = vadd.f32 %v644, %v997
        %999 = vmatmul.bf16.gmra.mxu0 %v606
        %v1000 = vpop.f32.mrf.mxu0
        %v1001 = vadd.f32 %v644, %v1000
        %v1002 = vpop.f32.mrf.mxu0
        %v1003 = vadd.f32 %v644, %v1002
        %1004 = vdwg.mxu0
        %v1005 = vxor.u32 %v819, 2147483648
        %v1006 = vxor.u32 %v868, 2147483648
        %v1007 = vxor.u32 %v917, 2147483648
        %v1008 = vxor.u32 %v966, 2147483648
        %v1009 = vxor.u32 %v821, 2147483648
        %v1010 = vxor.u32 %v870, 2147483648
        %v1011 = vxor.u32 %v919, 2147483648
        %v1012 = vxor.u32 %v968, 2147483648
        %v1013 = vxor.u32 %v824, 2147483648
        %v1014 = vxor.u32 %v873, 2147483648
        %v1015 = vxor.u32 %v922, 2147483648
        %v1016 = vxor.u32 %v971, 2147483648
        %v1017 = vxor.u32 %v826, 2147483648
        %v1018 = vxor.u32 %v875, 2147483648
        %v1019 = vxor.u32 %v924, 2147483648
        %v1020 = vxor.u32 %v973, 2147483648
        %v1021 = vxor.u32 %v829, 2147483648
        %v1022 = vxor.u32 %v878, 2147483648
        %v1023 = vxor.u32 %v927, 2147483648
        %v1024 = vxor.u32 %v976, 2147483648
        %v1025 = vxor.u32 %v831, 2147483648
        %v1026 = vxor.u32 %v880, 2147483648
        %v1027 = vxor.u32 %v929, 2147483648
        %v1028 = vxor.u32 %v978, 2147483648
        %v1029 = vxor.u32 %v834, 2147483648
        %v1030 = vxor.u32 %v883, 2147483648
        %v1031 = vxor.u32 %v932, 2147483648
        %v1032 = vxor.u32 %v981, 2147483648
        %v1033 = vxor.u32 %v836, 2147483648
        %v1034 = vxor.u32 %v885, 2147483648
        %v1035 = vxor.u32 %v934, 2147483648
        %v1036 = vxor.u32 %v983, 2147483648
        %v1037 = vxor.u32 %v839, 2147483648
        %v1038 = vxor.u32 %v888, 2147483648
        %v1039 = vxor.u32 %v937, 2147483648
        %v1040 = vxor.u32 %v986, 2147483648
        %v1041 = vxor.u32 %v841, 2147483648
        %v1042 = vxor.u32 %v890, 2147483648
        %v1043 = vxor.u32 %v939, 2147483648
        %v1044 = vxor.u32 %v988, 2147483648
        %v1045 = vxor.u32 %v844, 2147483648
        %v1046 = vxor.u32 %v893, 2147483648
        %v1047 = vxor.u32 %v942, 2147483648
        %v1048 = vxor.u32 %v991, 2147483648
        %v1049 = vxor.u32 %v846, 2147483648
        %v1050 = vxor.u32 %v895, 2147483648
        %v1051 = vxor.u32 %v944, 2147483648
        %v1052 = vxor.u32 %v993, 2147483648
        %v1053 = vxor.u32 %v849, 2147483648
        %v1054 = vxor.u32 %v898, 2147483648
        %v1055 = vxor.u32 %v947, 2147483648
        %v1056 = vxor.u32 %v996, 2147483648
        %v1057 = vxor.u32 %v851, 2147483648
        %v1058 = vxor.u32 %v900, 2147483648
        %v1059 = vxor.u32 %v949, 2147483648
        %v1060 = vxor.u32 %v998, 2147483648
        %v1061 = vxor.u32 %v854, 2147483648
        %v1062 = vxor.u32 %v903, 2147483648
        %v1063 = vxor.u32 %v952, 2147483648
        %v1064 = vxor.u32 %v1001, 2147483648
        %v1065 = vxor.u32 %v856, 2147483648
        %v1066 = vxor.u32 %v905, 2147483648
        %v1067 = vxor.u32 %v954, 2147483648
        %v1068 = vxor.u32 %v1003, 2147483648
        %v1069 = vmul.f32 %v1005, 1.442695
        %v1070 = vpow.pop %v1069
        %v1071 = vmul.f32 %v1006, 1.442695
        %v1072 = vpow.pop %v1071
        %v1073 = vmul.f32 %v1007, 1.442695
        %v1074 = vpow.pop %v1073
        %v1075 = vmul.f32 %v1008, 1.442695
        %v1076 = vpow.pop %v1075
        %v1077 = vmul.f32 %v1009, 1.442695
        %v1078 = vpow.pop %v1077
        %v1079 = vmul.f32 %v1010, 1.442695
        %v1080 = vpow.pop %v1079
        %v1081 = vmul.f32 %v1011, 1.442695
        %v1082 = vpow.pop %v1081
        %v1083 = vmul.f32 %v1012, 1.442695
        %v1084 = vpow.pop %v1083
        %v1085 = vmul.f32 %v1013, 1.442695
        %v1086 = vpow.pop %v1085
        %v1087 = vmul.f32 %v1014, 1.442695
        %v1088 = vpow.pop %v1087
        %v1089 = vmul.f32 %v1015, 1.442695
        %v1090 = vpow.pop %v1089
        %v1091 = vmul.f32 %v1016, 1.442695
        %v1092 = vpow.pop %v1091
        %v1093 = vmul.f32 %v1017, 1.442695
        %v1094 = vpow.pop %v1093
        %v1095 = vmul.f32 %v1018, 1.442695
        %v1096 = vpow.pop %v1095
        %v1097 = vmul.f32 %v1019, 1.442695
        %v1098 = vpow.pop %v1097
        %v1099 = vmul.f32 %v1020, 1.442695
        %v1100 = vpow.pop %v1099
        %v1101 = vmul.f32 %v1021, 1.442695
        %v1102 = vpow.pop %v1101
        %v1103 = vmul.f32 %v1022, 1.442695
        %v1104 = vpow.pop %v1103
        %v1105 = vmul.f32 %v1023, 1.442695
        %v1106 = vpow.pop %v1105
        %v1107 = vmul.f32 %v1024, 1.442695
        %v1108 = vpow.pop %v1107
        %v1109 = vmul.f32 %v1025, 1.442695
        %v1110 = vpow.pop %v1109
        %v1111 = vmul.f32 %v1026, 1.442695
        %v1112 = vpow.pop %v1111
        %v1113 = vmul.f32 %v1027, 1.442695
        %v1114 = vpow.pop %v1113
        %v1115 = vmul.f32 %v1028, 1.442695
        %v1116 = vpow.pop %v1115
        %v1117 = vmul.f32 %v1029, 1.442695
        %v1118 = vpow.pop %v1117
        %v1119 = vmul.f32 %v1030, 1.442695
        %v1120 = vpow.pop %v1119
        %v1121 = vmul.f32 %v1031, 1.442695
        %v1122 = vpow.pop %v1121
        %v1123 = vmul.f32 %v1032, 1.442695
        %v1124 = vpow.pop %v1123
        %v1125 = vmul.f32 %v1033, 1.442695
        %v1126 = vpow.pop %v1125
        %v1127 = vmul.f32 %v1034, 1.442695
        %v1128 = vpow.pop %v1127
        %v1129 = vmul.f32 %v1035, 1.442695
        %v1130 = vpow.pop %v1129
        %v1131 = vmul.f32 %v1036, 1.442695
        %v1132 = vpow.pop %v1131
        %v1133 = vmul.f32 %v1037, 1.442695
        %v1134 = vpow.pop %v1133
        %v1135 = vmul.f32 %v1038, 1.442695
        %v1136 = vpow.pop %v1135
        %v1137 = vmul.f32 %v1039, 1.442695
        %v1138 = vpow.pop %v1137
        %v1139 = vmul.f32 %v1040, 1.442695
        %v1140 = vpow.pop %v1139
        %v1141 = vmul.f32 %v1041, 1.442695
        %v1142 = vpow.pop %v1141
        %v1143 = vmul.f32 %v1042, 1.442695
        %v1144 = vpow.pop %v1143
        %v1145 = vmul.f32 %v1043, 1.442695
        %v1146 = vpow.pop %v1145
        %v1147 = vmul.f32 %v1044, 1.442695
        %v1148 = vpow.pop %v1147
        %v1149 = vmul.f32 %v1045, 1.442695
        %v1150 = vpow.pop %v1149
        %v1151 = vmul.f32 %v1046, 1.442695
        %v1152 = vpow.pop %v1151
        %v1153 = vmul.f32 %v1047, 1.442695
        %v1154 = vpow.pop %v1153
        %v1155 = vmul.f32 %v1048, 1.442695
        %v1156 = vpow.pop %v1155
        %v1157 = vmul.f32 %v1049, 1.442695
        %v1158 = vpow.pop %v1157
        %v1159 = vmul.f32 %v1050, 1.442695
        %v1160 = vpow.pop %v1159
        %v1161 = vmul.f32 %v1051, 1.442695
        %v1162 = vpow.pop %v1161
        %v1163 = vmul.f32 %v1052, 1.442695
        %v1164 = vpow.pop %v1163
        %v1165 = vmul.f32 %v1053, 1.442695
        %v1166 = vpow.pop %v1165
        %v1167 = vmul.f32 %v1054, 1.442695
        %v1168 = vpow.pop %v1167
        %v1169 = vmul.f32 %v1055, 1.442695
        %v1170 = vpow.pop %v1169
        %v1171 = vmul.f32 %v1056, 1.442695
        %v1172 = vpow.pop %v1171
        %v1173 = vmul.f32 %v1057, 1.442695
        %v1174 = vpow.pop %v1173
        %v1175 = vmul.f32 %v1058, 1.442695
        %v1176 = vpow.pop %v1175
        %v1177 = vmul.f32 %v1059, 1.442695
        %v1178 = vpow.pop %v1177
        %v1179 = vmul.f32 %v1060, 1.442695
        %v1180 = vpow.pop %v1179
        %v1181 = vmul.f32 %v1061, 1.442695
        %v1182 = vpow.pop %v1181
        %v1183 = vmul.f32 %v1062, 1.442695
        %v1184 = vpow.pop %v1183
        %v1185 = vmul.f32 %v1063, 1.442695
        %v1186 = vpow.pop %v1185
        %v1187 = vmul.f32 %v1064, 1.442695
        %v1188 = vpow.pop %v1187
        %v1189 = vmul.f32 %v1065, 1.442695
        %v1190 = vpow.pop %v1189
        %v1191 = vmul.f32 %v1066, 1.442695
        %v1192 = vpow.pop %v1191
        %v1193 = vmul.f32 %v1067, 1.442695
        %v1194 = vpow.pop %v1193
        %v1195 = vmul.f32 %v1068, 1.442695
        %v1196 = vpow.pop %v1195
        %v1197 = vadd.f32 %v1070, 1.0
        %v1198 = vadd.f32 %v1072, 1.0
        %v1199 = vadd.f32 %v1074, 1.0
        %v1200 = vadd.f32 %v1076, 1.0
        %v1201 = vadd.f32 %v1078, 1.0
        %v1202 = vadd.f32 %v1080, 1.0
        %v1203 = vadd.f32 %v1082, 1.0
        %v1204 = vadd.f32 %v1084, 1.0
        %v1205 = vadd.f32 %v1086, 1.0
        %v1206 = vadd.f32 %v1088, 1.0
        %v1207 = vadd.f32 %v1090, 1.0
        %v1208 = vadd.f32 %v1092, 1.0
        %v1209 = vadd.f32 %v1094, 1.0
        %v1210 = vadd.f32 %v1096, 1.0
        %v1211 = vadd.f32 %v1098, 1.0
        %v1212 = vadd.f32 %v1100, 1.0
        %v1213 = vadd.f32 %v1102, 1.0
        %v1214 = vadd.f32 %v1104, 1.0
        %v1215 = vadd.f32 %v1106, 1.0
        %v1216 = vadd.f32 %v1108, 1.0
        %v1217 = vadd.f32 %v1110, 1.0
        %v1218 = vadd.f32 %v1112, 1.0
        %v1219 = vadd.f32 %v1114, 1.0
        %v1220 = vadd.f32 %v1116, 1.0
        %v1221 = vadd.f32 %v1118, 1.0
        %v1222 = vadd.f32 %v1120, 1.0
        %v1223 = vadd.f32 %v1122, 1.0
        %v1224 = vadd.f32 %v1124, 1.0
        %v1225 = vadd.f32 %v1126, 1.0
        %v1226 = vadd.f32 %v1128, 1.0
        %v1227 = vadd.f32 %v1130, 1.0
        %v1228 = vadd.f32 %v1132, 1.0
        %v1229 = vadd.f32 %v1134, 1.0
        %v1230 = vadd.f32 %v1136, 1.0
        %v1231 = vadd.f32 %v1138, 1.0
        %v1232 = vadd.f32 %v1140, 1.0
        %v1233 = vadd.f32 %v1142, 1.0
        %v1234 = vadd.f32 %v1144, 1.0
        %v1235 = vadd.f32 %v1146, 1.0
        %v1236 = vadd.f32 %v1148, 1.0
        %v1237 = vadd.f32 %v1150, 1.0
        %v1238 = vadd.f32 %v1152, 1.0
        %v1239 = vadd.f32 %v1154, 1.0
        %v1240 = vadd.f32 %v1156, 1.0
        %v1241 = vadd.f32 %v1158, 1.0
        %v1242 = vadd.f32 %v1160, 1.0
        %v1243 = vadd.f32 %v1162, 1.0
        %v1244 = vadd.f32 %v1164, 1.0
        %v1245 = vadd.f32 %v1166, 1.0
        %v1246 = vadd.f32 %v1168, 1.0
        %v1247 = vadd.f32 %v1170, 1.0
        %v1248 = vadd.f32 %v1172, 1.0
        %v1249 = vadd.f32 %v1174, 1.0
        %v1250 = vadd.f32 %v1176, 1.0
        %v1251 = vadd.f32 %v1178, 1.0
        %v1252 = vadd.f32 %v1180, 1.0
        %v1253 = vadd.f32 %v1182, 1.0
        %v1254 = vadd.f32 %v1184, 1.0
        %v1255 = vadd.f32 %v1186, 1.0
        %v1256 = vadd.f32 %v1188, 1.0
        %v1257 = vadd.f32 %v1190, 1.0
        %v1258 = vadd.f32 %v1192, 1.0
        %v1259 = vadd.f32 %v1194, 1.0
        %v1260 = vadd.f32 %v1196, 1.0
        %v1261 = vrcp.pop %v1197
        %v1262 = vmul.f32 %v1197, %v1261
        %v1263 = vsub.f32 1.0, %v1262
        %v1264 = vmul.f32 %v1261, %v1263
        %v1265 = vadd.f32 %v1261, %v1264
        %vm1266 = vweird.f32 %v1197
        %vm1267 = vweird.f32 %v1261
        %vm1268 = vmor %vm1266, %vm1267
        %v1269 = vsel %vm1268, %v1261, %v1265
        %v1270 = vand.u32 2147483647, %v1197
        %vm1271 = vcmp.eq.f32.partialorder %v1270, 8.507059e+37
        %v1272 = vand.u32 %v1197, 2147483648
        %v1273 = vor.u32 1.1754944e-38, %v1272
        %v1274 = vsel %vm1271, %v1273, %v1269
        %v1275 = vmul.f32 1.0, %v1274
        %v1276 = vrcp.pop %v1198
        %v1277 = vmul.f32 %v1198, %v1276
        %v1278 = vsub.f32 1.0, %v1277
        %v1279 = vmul.f32 %v1276, %v1278
        %v1280 = vadd.f32 %v1276, %v1279
        %vm1281 = vweird.f32 %v1198
        %vm1282 = vweird.f32 %v1276
        %vm1283 = vmor %vm1281, %vm1282
        %v1284 = vsel %vm1283, %v1276, %v1280
        %v1285 = vand.u32 2147483647, %v1198
        %vm1286 = vcmp.eq.f32.partialorder %v1285, 8.507059e+37
        %v1287 = vand.u32 %v1198, 2147483648
        %v1288 = vor.u32 1.1754944e-38, %v1287
        %v1289 = vsel %vm1286, %v1288, %v1284
        %v1290 = vmul.f32 1.0, %v1289
        %v1291 = vrcp.pop %v1199
        %v1292 = vmul.f32 %v1199, %v1291
        %v1293 = vsub.f32 1.0, %v1292
        %v1294 = vmul.f32 %v1291, %v1293
        %v1295 = vadd.f32 %v1291, %v1294
        %vm1296 = vweird.f32 %v1199
        %vm1297 = vweird.f32 %v1291
        %vm1298 = vmor %vm1296, %vm1297
        %v1299 = vsel %vm1298, %v1291, %v1295
        %v1300 = vand.u32 2147483647, %v1199
        %vm1301 = vcmp.eq.f32.partialorder %v1300, 8.507059e+37
        %v1302 = vand.u32 %v1199, 2147483648
        %v1303 = vor.u32 1.1754944e-38, %v1302
        %v1304 = vsel %vm1301, %v1303, %v1299
        %v1305 = vmul.f32 1.0, %v1304
        %v1306 = vrcp.pop %v1200
        %v1307 = vmul.f32 %v1200, %v1306
        %v1308 = vsub.f32 1.0, %v1307
        %v1309 = vmul.f32 %v1306, %v1308
        %v1310 = vadd.f32 %v1306, %v1309
        %vm1311 = vweird.f32 %v1200
        %vm1312 = vweird.f32 %v1306
        %vm1313 = vmor %vm1311, %vm1312
        %v1314 = vsel %vm1313, %v1306, %v1310
        %v1315 = vand.u32 2147483647, %v1200
        %vm1316 = vcmp.eq.f32.partialorder %v1315, 8.507059e+37
        %v1317 = vand.u32 %v1200, 2147483648
        %v1318 = vor.u32 1.1754944e-38, %v1317
        %v1319 = vsel %vm1316, %v1318, %v1314
        %v1320 = vmul.f32 1.0, %v1319
        %v1321 = vrcp.pop %v1201
        %v1322 = vmul.f32 %v1201, %v1321
        %v1323 = vsub.f32 1.0, %v1322
        %v1324 = vmul.f32 %v1321, %v1323
        %v1325 = vadd.f32 %v1321, %v1324
        %vm1326 = vweird.f32 %v1201
        %vm1327 = vweird.f32 %v1321
        %vm1328 = vmor %vm1326, %vm1327
        %v1329 = vsel %vm1328, %v1321, %v1325
        %v1330 = vand.u32 2147483647, %v1201
        %vm1331 = vcmp.eq.f32.partialorder %v1330, 8.507059e+37
        %v1332 = vand.u32 %v1201, 2147483648
        %v1333 = vor.u32 1.1754944e-38, %v1332
        %v1334 = vsel %vm1331, %v1333, %v1329
        %v1335 = vmul.f32 1.0, %v1334
        %v1336 = vrcp.pop %v1202
        %v1337 = vmul.f32 %v1202, %v1336
        %v1338 = vsub.f32 1.0, %v1337
        %v1339 = vmul.f32 %v1336, %v1338
        %v1340 = vadd.f32 %v1336, %v1339
        %vm1341 = vweird.f32 %v1202
        %vm1342 = vweird.f32 %v1336
        %vm1343 = vmor %vm1341, %vm1342
        %v1344 = vsel %vm1343, %v1336, %v1340
        %v1345 = vand.u32 2147483647, %v1202
        %vm1346 = vcmp.eq.f32.partialorder %v1345, 8.507059e+37
        %v1347 = vand.u32 %v1202, 2147483648
        %v1348 = vor.u32 1.1754944e-38, %v1347
        %v1349 = vsel %vm1346, %v1348, %v1344
        %v1350 = vmul.f32 1.0, %v1349
        %v1351 = vrcp.pop %v1203
        %v1352 = vmul.f32 %v1203, %v1351
        %v1353 = vsub.f32 1.0, %v1352
        %v1354 = vmul.f32 %v1351, %v1353
        %v1355 = vadd.f32 %v1351, %v1354
        %vm1356 = vweird.f32 %v1203
        %vm1357 = vweird.f32 %v1351
        %vm1358 = vmor %vm1356, %vm1357
        %v1359 = vsel %vm1358, %v1351, %v1355
        %v1360 = vand.u32 2147483647, %v1203
        %vm1361 = vcmp.eq.f32.partialorder %v1360, 8.507059e+37
        %v1362 = vand.u32 %v1203, 2147483648
        %v1363 = vor.u32 1.1754944e-38, %v1362
        %v1364 = vsel %vm1361, %v1363, %v1359
        %v1365 = vmul.f32 1.0, %v1364
        %v1366 = vrcp.pop %v1204
        %v1367 = vmul.f32 %v1204, %v1366
        %v1368 = vsub.f32 1.0, %v1367
        %v1369 = vmul.f32 %v1366, %v1368
        %v1370 = vadd.f32 %v1366, %v1369
        %vm1371 = vweird.f32 %v1204
        %vm1372 = vweird.f32 %v1366
        %vm1373 = vmor %vm1371, %vm1372
        %v1374 = vsel %vm1373, %v1366, %v1370
        %v1375 = vand.u32 2147483647, %v1204
        %vm1376 = vcmp.eq.f32.partialorder %v1375, 8.507059e+37
        %v1377 = vand.u32 %v1204, 2147483648
        %v1378 = vor.u32 1.1754944e-38, %v1377
        %v1379 = vsel %vm1376, %v1378, %v1374
        %v1380 = vmul.f32 1.0, %v1379
        %v1381 = vrcp.pop %v1205
        %v1382 = vmul.f32 %v1205, %v1381
        %v1383 = vsub.f32 1.0, %v1382
        %v1384 = vmul.f32 %v1381, %v1383
        %v1385 = vadd.f32 %v1381, %v1384
        %vm1386 = vweird.f32 %v1205
        %vm1387 = vweird.f32 %v1381
        %vm1388 = vmor %vm1386, %vm1387
        %v1389 = vsel %vm1388, %v1381, %v1385
        %v1390 = vand.u32 2147483647, %v1205
        %vm1391 = vcmp.eq.f32.partialorder %v1390, 8.507059e+37
        %v1392 = vand.u32 %v1205, 2147483648
        %v1393 = vor.u32 1.1754944e-38, %v1392
        %v1394 = vsel %vm1391, %v1393, %v1389
        %v1395 = vmul.f32 1.0, %v1394
        %v1396 = vrcp.pop %v1206
        %v1397 = vmul.f32 %v1206, %v1396
        %v1398 = vsub.f32 1.0, %v1397
        %v1399 = vmul.f32 %v1396, %v1398
        %v1400 = vadd.f32 %v1396, %v1399
        %vm1401 = vweird.f32 %v1206
        %vm1402 = vweird.f32 %v1396
        %vm1403 = vmor %vm1401, %vm1402
        %v1404 = vsel %vm1403, %v1396, %v1400
        %v1405 = vand.u32 2147483647, %v1206
        %vm1406 = vcmp.eq.f32.partialorder %v1405, 8.507059e+37
        %v1407 = vand.u32 %v1206, 2147483648
        %v1408 = vor.u32 1.1754944e-38, %v1407
        %v1409 = vsel %vm1406, %v1408, %v1404
        %v1410 = vmul.f32 1.0, %v1409
        %v1411 = vrcp.pop %v1207
        %v1412 = vmul.f32 %v1207, %v1411
        %v1413 = vsub.f32 1.0, %v1412
        %v1414 = vmul.f32 %v1411, %v1413
        %v1415 = vadd.f32 %v1411, %v1414
        %vm1416 = vweird.f32 %v1207
        %vm1417 = vweird.f32 %v1411
        %vm1418 = vmor %vm1416, %vm1417
        %v1419 = vsel %vm1418, %v1411, %v1415
        %v1420 = vand.u32 2147483647, %v1207
        %vm1421 = vcmp.eq.f32.partialorder %v1420, 8.507059e+37
        %v1422 = vand.u32 %v1207, 2147483648
        %v1423 = vor.u32 1.1754944e-38, %v1422
        %v1424 = vsel %vm1421, %v1423, %v1419
        %v1425 = vmul.f32 1.0, %v1424
        %v1426 = vrcp.pop %v1208
        %v1427 = vmul.f32 %v1208, %v1426
        %v1428 = vsub.f32 1.0, %v1427
        %v1429 = vmul.f32 %v1426, %v1428
        %v1430 = vadd.f32 %v1426, %v1429
        %vm1431 = vweird.f32 %v1208
        %vm1432 = vweird.f32 %v1426
        %vm1433 = vmor %vm1431, %vm1432
        %v1434 = vsel %vm1433, %v1426, %v1430
        %v1435 = vand.u32 2147483647, %v1208
        %vm1436 = vcmp.eq.f32.partialorder %v1435, 8.507059e+37
        %v1437 = vand.u32 %v1208, 2147483648
        %v1438 = vor.u32 1.1754944e-38, %v1437
        %v1439 = vsel %vm1436, %v1438, %v1434
        %v1440 = vmul.f32 1.0, %v1439
        %v1441 = vrcp.pop %v1209
        %v1442 = vmul.f32 %v1209, %v1441
        %v1443 = vsub.f32 1.0, %v1442
        %v1444 = vmul.f32 %v1441, %v1443
        %v1445 = vadd.f32 %v1441, %v1444
        %vm1446 = vweird.f32 %v1209
        %vm1447 = vweird.f32 %v1441
        %vm1448 = vmor %vm1446, %vm1447
        %v1449 = vsel %vm1448, %v1441, %v1445
        %v1450 = vand.u32 2147483647, %v1209
        %vm1451 = vcmp.eq.f32.partialorder %v1450, 8.507059e+37
        %v1452 = vand.u32 %v1209, 2147483648
        %v1453 = vor.u32 1.1754944e-38, %v1452
        %v1454 = vsel %vm1451, %v1453, %v1449
        %v1455 = vmul.f32 1.0, %v1454
        %v1456 = vrcp.pop %v1210
        %v1457 = vmul.f32 %v1210, %v1456
        %v1458 = vsub.f32 1.0, %v1457
        %v1459 = vmul.f32 %v1456, %v1458
        %v1460 = vadd.f32 %v1456, %v1459
        %vm1461 = vweird.f32 %v1210
        %vm1462 = vweird.f32 %v1456
        %vm1463 = vmor %vm1461, %vm1462
        %v1464 = vsel %vm1463, %v1456, %v1460
        %v1465 = vand.u32 2147483647, %v1210
        %vm1466 = vcmp.eq.f32.partialorder %v1465, 8.507059e+37
        %v1467 = vand.u32 %v1210, 2147483648
        %v1468 = vor.u32 1.1754944e-38, %v1467
        %v1469 = vsel %vm1466, %v1468, %v1464
        %v1470 = vmul.f32 1.0, %v1469
        %v1471 = vrcp.pop %v1211
        %v1472 = vmul.f32 %v1211, %v1471
        %v1473 = vsub.f32 1.0, %v1472
        %v1474 = vmul.f32 %v1471, %v1473
        %v1475 = vadd.f32 %v1471, %v1474
        %vm1476 = vweird.f32 %v1211
        %vm1477 = vweird.f32 %v1471
        %vm1478 = vmor %vm1476, %vm1477
        %v1479 = vsel %vm1478, %v1471, %v1475
        %v1480 = vand.u32 2147483647, %v1211
        %vm1481 = vcmp.eq.f32.partialorder %v1480, 8.507059e+37
        %v1482 = vand.u32 %v1211, 2147483648
        %v1483 = vor.u32 1.1754944e-38, %v1482
        %v1484 = vsel %vm1481, %v1483, %v1479
        %v1485 = vmul.f32 1.0, %v1484
        %v1486 = vrcp.pop %v1212
        %v1487 = vmul.f32 %v1212, %v1486
        %v1488 = vsub.f32 1.0, %v1487
        %v1489 = vmul.f32 %v1486, %v1488
        %v1490 = vadd.f32 %v1486, %v1489
        %vm1491 = vweird.f32 %v1212
        %vm1492 = vweird.f32 %v1486
        %vm1493 = vmor %vm1491, %vm1492
        %v1494 = vsel %vm1493, %v1486, %v1490
        %v1495 = vand.u32 2147483647, %v1212
        %vm1496 = vcmp.eq.f32.partialorder %v1495, 8.507059e+37
        %v1497 = vand.u32 %v1212, 2147483648
        %v1498 = vor.u32 1.1754944e-38, %v1497
        %v1499 = vsel %vm1496, %v1498, %v1494
        %v1500 = vmul.f32 1.0, %v1499
        %v1501 = vrcp.pop %v1213
        %v1502 = vmul.f32 %v1213, %v1501
        %v1503 = vsub.f32 1.0, %v1502
        %v1504 = vmul.f32 %v1501, %v1503
        %v1505 = vadd.f32 %v1501, %v1504
        %vm1506 = vweird.f32 %v1213
        %vm1507 = vweird.f32 %v1501
        %vm1508 = vmor %vm1506, %vm1507
        %v1509 = vsel %vm1508, %v1501, %v1505
        %v1510 = vand.u32 2147483647, %v1213
        %vm1511 = vcmp.eq.f32.partialorder %v1510, 8.507059e+37
        %v1512 = vand.u32 %v1213, 2147483648
        %v1513 = vor.u32 1.1754944e-38, %v1512
        %v1514 = vsel %vm1511, %v1513, %v1509
        %v1515 = vmul.f32 1.0, %v1514
        %v1516 = vrcp.pop %v1214
        %v1517 = vmul.f32 %v1214, %v1516
        %v1518 = vsub.f32 1.0, %v1517
        %v1519 = vmul.f32 %v1516, %v1518
        %v1520 = vadd.f32 %v1516, %v1519
        %vm1521 = vweird.f32 %v1214
        %vm1522 = vweird.f32 %v1516
        %vm1523 = vmor %vm1521, %vm1522
        %v1524 = vsel %vm1523, %v1516, %v1520
        %v1525 = vand.u32 2147483647, %v1214
        %vm1526 = vcmp.eq.f32.partialorder %v1525, 8.507059e+37
        %v1527 = vand.u32 %v1214, 2147483648
        %v1528 = vor.u32 1.1754944e-38, %v1527
        %v1529 = vsel %vm1526, %v1528, %v1524
        %v1530 = vmul.f32 1.0, %v1529
        %v1531 = vrcp.pop %v1215
        %v1532 = vmul.f32 %v1215, %v1531
        %v1533 = vsub.f32 1.0, %v1532
        %v1534 = vmul.f32 %v1531, %v1533
        %v1535 = vadd.f32 %v1531, %v1534
        %vm1536 = vweird.f32 %v1215
        %vm1537 = vweird.f32 %v1531
        %vm1538 = vmor %vm1536, %vm1537
        %v1539 = vsel %vm1538, %v1531, %v1535
        %v1540 = vand.u32 2147483647, %v1215
        %vm1541 = vcmp.eq.f32.partialorder %v1540, 8.507059e+37
        %v1542 = vand.u32 %v1215, 2147483648
        %v1543 = vor.u32 1.1754944e-38, %v1542
        %v1544 = vsel %vm1541, %v1543, %v1539
        %v1545 = vmul.f32 1.0, %v1544
        %v1546 = vrcp.pop %v1216
        %v1547 = vmul.f32 %v1216, %v1546
        %v1548 = vsub.f32 1.0, %v1547
        %v1549 = vmul.f32 %v1546, %v1548
        %v1550 = vadd.f32 %v1546, %v1549
        %vm1551 = vweird.f32 %v1216
        %vm1552 = vweird.f32 %v1546
        %vm1553 = vmor %vm1551, %vm1552
        %v1554 = vsel %vm1553, %v1546, %v1550
        %v1555 = vand.u32 2147483647, %v1216
        %vm1556 = vcmp.eq.f32.partialorder %v1555, 8.507059e+37
        %v1557 = vand.u32 %v1216, 2147483648
        %v1558 = vor.u32 1.1754944e-38, %v1557
        %v1559 = vsel %vm1556, %v1558, %v1554
        %v1560 = vmul.f32 1.0, %v1559
        %v1561 = vrcp.pop %v1217
        %v1562 = vmul.f32 %v1217, %v1561
        %v1563 = vsub.f32 1.0, %v1562
        %v1564 = vmul.f32 %v1561, %v1563
        %v1565 = vadd.f32 %v1561, %v1564
        %vm1566 = vweird.f32 %v1217
        %vm1567 = vweird.f32 %v1561
        %vm1568 = vmor %vm1566, %vm1567
        %v1569 = vsel %vm1568, %v1561, %v1565
        %v1570 = vand.u32 2147483647, %v1217
        %vm1571 = vcmp.eq.f32.partialorder %v1570, 8.507059e+37
        %v1572 = vand.u32 %v1217, 2147483648
        %v1573 = vor.u32 1.1754944e-38, %v1572
        %v1574 = vsel %vm1571, %v1573, %v1569
        %v1575 = vmul.f32 1.0, %v1574
        %v1576 = vrcp.pop %v1218
        %v1577 = vmul.f32 %v1218, %v1576
        %v1578 = vsub.f32 1.0, %v1577
        %v1579 = vmul.f32 %v1576, %v1578
        %v1580 = vadd.f32 %v1576, %v1579
        %vm1581 = vweird.f32 %v1218
        %vm1582 = vweird.f32 %v1576
        %vm1583 = vmor %vm1581, %vm1582
        %v1584 = vsel %vm1583, %v1576, %v1580
        %v1585 = vand.u32 2147483647, %v1218
        %vm1586 = vcmp.eq.f32.partialorder %v1585, 8.507059e+37
        %v1587 = vand.u32 %v1218, 2147483648
        %v1588 = vor.u32 1.1754944e-38, %v1587
        %v1589 = vsel %vm1586, %v1588, %v1584
        %v1590 = vmul.f32 1.0, %v1589
        %v1591 = vrcp.pop %v1219
        %v1592 = vmul.f32 %v1219, %v1591
        %v1593 = vsub.f32 1.0, %v1592
        %v1594 = vmul.f32 %v1591, %v1593
        %v1595 = vadd.f32 %v1591, %v1594
        %vm1596 = vweird.f32 %v1219
        %vm1597 = vweird.f32 %v1591
        %vm1598 = vmor %vm1596, %vm1597
        %v1599 = vsel %vm1598, %v1591, %v1595
        %v1600 = vand.u32 2147483647, %v1219
        %vm1601 = vcmp.eq.f32.partialorder %v1600, 8.507059e+37
        %v1602 = vand.u32 %v1219, 2147483648
        %v1603 = vor.u32 1.1754944e-38, %v1602
        %v1604 = vsel %vm1601, %v1603, %v1599
        %v1605 = vmul.f32 1.0, %v1604
        %v1606 = vrcp.pop %v1220
        %v1607 = vmul.f32 %v1220, %v1606
        %v1608 = vsub.f32 1.0, %v1607
        %v1609 = vmul.f32 %v1606, %v1608
        %v1610 = vadd.f32 %v1606, %v1609
        %vm1611 = vweird.f32 %v1220
        %vm1612 = vweird.f32 %v1606
        %vm1613 = vmor %vm1611, %vm1612
        %v1614 = vsel %vm1613, %v1606, %v1610
        %v1615 = vand.u32 2147483647, %v1220
        %vm1616 = vcmp.eq.f32.partialorder %v1615, 8.507059e+37
        %v1617 = vand.u32 %v1220, 2147483648
        %v1618 = vor.u32 1.1754944e-38, %v1617
        %v1619 = vsel %vm1616, %v1618, %v1614
        %v1620 = vmul.f32 1.0, %v1619
        %v1621 = vrcp.pop %v1221
        %v1622 = vmul.f32 %v1221, %v1621
        %v1623 = vsub.f32 1.0, %v1622
        %v1624 = vmul.f32 %v1621, %v1623
        %v1625 = vadd.f32 %v1621, %v1624
        %vm1626 = vweird.f32 %v1221
        %vm1627 = vweird.f32 %v1621
        %vm1628 = vmor %vm1626, %vm1627
        %v1629 = vsel %vm1628, %v1621, %v1625
        %v1630 = vand.u32 2147483647, %v1221
        %vm1631 = vcmp.eq.f32.partialorder %v1630, 8.507059e+37
        %v1632 = vand.u32 %v1221, 2147483648
        %v1633 = vor.u32 1.1754944e-38, %v1632
        %v1634 = vsel %vm1631, %v1633, %v1629
        %v1635 = vmul.f32 1.0, %v1634
        %v1636 = vrcp.pop %v1222
        %v1637 = vmul.f32 %v1222, %v1636
        %v1638 = vsub.f32 1.0, %v1637
        %v1639 = vmul.f32 %v1636, %v1638
        %v1640 = vadd.f32 %v1636, %v1639
        %vm1641 = vweird.f32 %v1222
        %vm1642 = vweird.f32 %v1636
        %vm1643 = vmor %vm1641, %vm1642
        %v1644 = vsel %vm1643, %v1636, %v1640
        %v1645 = vand.u32 2147483647, %v1222
        %vm1646 = vcmp.eq.f32.partialorder %v1645, 8.507059e+37
        %v1647 = vand.u32 %v1222, 2147483648
        %v1648 = vor.u32 1.1754944e-38, %v1647
        %v1649 = vsel %vm1646, %v1648, %v1644
        %v1650 = vmul.f32 1.0, %v1649
        %v1651 = vrcp.pop %v1223
        %v1652 = vmul.f32 %v1223, %v1651
        %v1653 = vsub.f32 1.0, %v1652
        %v1654 = vmul.f32 %v1651, %v1653
        %v1655 = vadd.f32 %v1651, %v1654
        %vm1656 = vweird.f32 %v1223
        %vm1657 = vweird.f32 %v1651
        %vm1658 = vmor %vm1656, %vm1657
        %v1659 = vsel %vm1658, %v1651, %v1655
        %v1660 = vand.u32 2147483647, %v1223
        %vm1661 = vcmp.eq.f32.partialorder %v1660, 8.507059e+37
        %v1662 = vand.u32 %v1223, 2147483648
        %v1663 = vor.u32 1.1754944e-38, %v1662
        %v1664 = vsel %vm1661, %v1663, %v1659
        %v1665 = vmul.f32 1.0, %v1664
        %v1666 = vrcp.pop %v1224
        %v1667 = vmul.f32 %v1224, %v1666
        %v1668 = vsub.f32 1.0, %v1667
        %v1669 = vmul.f32 %v1666, %v1668
        %v1670 = vadd.f32 %v1666, %v1669
        %vm1671 = vweird.f32 %v1224
        %vm1672 = vweird.f32 %v1666
        %vm1673 = vmor %vm1671, %vm1672
        %v1674 = vsel %vm1673, %v1666, %v1670
        %v1675 = vand.u32 2147483647, %v1224
        %vm1676 = vcmp.eq.f32.partialorder %v1675, 8.507059e+37
        %v1677 = vand.u32 %v1224, 2147483648
        %v1678 = vor.u32 1.1754944e-38, %v1677
        %v1679 = vsel %vm1676, %v1678, %v1674
        %v1680 = vmul.f32 1.0, %v1679
        %v1681 = vrcp.pop %v1225
        %v1682 = vmul.f32 %v1225, %v1681
        %v1683 = vsub.f32 1.0, %v1682
        %v1684 = vmul.f32 %v1681, %v1683
        %v1685 = vadd.f32 %v1681, %v1684
        %vm1686 = vweird.f32 %v1225
        %vm1687 = vweird.f32 %v1681
        %vm1688 = vmor %vm1686, %vm1687
        %v1689 = vsel %vm1688, %v1681, %v1685
        %v1690 = vand.u32 2147483647, %v1225
        %vm1691 = vcmp.eq.f32.partialorder %v1690, 8.507059e+37
        %v1692 = vand.u32 %v1225, 2147483648
        %v1693 = vor.u32 1.1754944e-38, %v1692
        %v1694 = vsel %vm1691, %v1693, %v1689
        %v1695 = vmul.f32 1.0, %v1694
        %v1696 = vrcp.pop %v1226
        %v1697 = vmul.f32 %v1226, %v1696
        %v1698 = vsub.f32 1.0, %v1697
        %v1699 = vmul.f32 %v1696, %v1698
        %v1700 = vadd.f32 %v1696, %v1699
        %vm1701 = vweird.f32 %v1226
        %vm1702 = vweird.f32 %v1696
        %vm1703 = vmor %vm1701, %vm1702
        %v1704 = vsel %vm1703, %v1696, %v1700
        %v1705 = vand.u32 2147483647, %v1226
        %vm1706 = vcmp.eq.f32.partialorder %v1705, 8.507059e+37
        %v1707 = vand.u32 %v1226, 2147483648
        %v1708 = vor.u32 1.1754944e-38, %v1707
        %v1709 = vsel %vm1706, %v1708, %v1704
        %v1710 = vmul.f32 1.0, %v1709
        %v1711 = vrcp.pop %v1227
        %v1712 = vmul.f32 %v1227, %v1711
        %v1713 = vsub.f32 1.0, %v1712
        %v1714 = vmul.f32 %v1711, %v1713
        %v1715 = vadd.f32 %v1711, %v1714
        %vm1716 = vweird.f32 %v1227
        %vm1717 = vweird.f32 %v1711
        %vm1718 = vmor %vm1716, %vm1717
        %v1719 = vsel %vm1718, %v1711, %v1715
        %v1720 = vand.u32 2147483647, %v1227
        %vm1721 = vcmp.eq.f32.partialorder %v1720, 8.507059e+37
        %v1722 = vand.u32 %v1227, 2147483648
        %v1723 = vor.u32 1.1754944e-38, %v1722
        %v1724 = vsel %vm1721, %v1723, %v1719
        %v1725 = vmul.f32 1.0, %v1724
        %v1726 = vrcp.pop %v1228
        %v1727 = vmul.f32 %v1228, %v1726
        %v1728 = vsub.f32 1.0, %v1727
        %v1729 = vmul.f32 %v1726, %v1728
        %v1730 = vadd.f32 %v1726, %v1729
        %vm1731 = vweird.f32 %v1228
        %vm1732 = vweird.f32 %v1726
        %vm1733 = vmor %vm1731, %vm1732
        %v1734 = vsel %vm1733, %v1726, %v1730
        %v1735 = vand.u32 2147483647, %v1228
        %vm1736 = vcmp.eq.f32.partialorder %v1735, 8.507059e+37
        %v1737 = vand.u32 %v1228, 2147483648
        %v1738 = vor.u32 1.1754944e-38, %v1737
        %v1739 = vsel %vm1736, %v1738, %v1734
        %v1740 = vmul.f32 1.0, %v1739
        %v1741 = vrcp.pop %v1229
        %v1742 = vmul.f32 %v1229, %v1741
        %v1743 = vsub.f32 1.0, %v1742
        %v1744 = vmul.f32 %v1741, %v1743
        %v1745 = vadd.f32 %v1741, %v1744
        %vm1746 = vweird.f32 %v1229
        %vm1747 = vweird.f32 %v1741
        %vm1748 = vmor %vm1746, %vm1747
        %v1749 = vsel %vm1748, %v1741, %v1745
        %v1750 = vand.u32 2147483647, %v1229
        %vm1751 = vcmp.eq.f32.partialorder %v1750, 8.507059e+37
        %v1752 = vand.u32 %v1229, 2147483648
        %v1753 = vor.u32 1.1754944e-38, %v1752
        %v1754 = vsel %vm1751, %v1753, %v1749
        %v1755 = vmul.f32 1.0, %v1754
        %v1756 = vrcp.pop %v1230
        %v1757 = vmul.f32 %v1230, %v1756
        %v1758 = vsub.f32 1.0, %v1757
        %v1759 = vmul.f32 %v1756, %v1758
        %v1760 = vadd.f32 %v1756, %v1759
        %vm1761 = vweird.f32 %v1230
        %vm1762 = vweird.f32 %v1756
        %vm1763 = vmor %vm1761, %vm1762
        %v1764 = vsel %vm1763, %v1756, %v1760
        %v1765 = vand.u32 2147483647, %v1230
        %vm1766 = vcmp.eq.f32.partialorder %v1765, 8.507059e+37
        %v1767 = vand.u32 %v1230, 2147483648
        %v1768 = vor.u32 1.1754944e-38, %v1767
        %v1769 = vsel %vm1766, %v1768, %v1764
        %v1770 = vmul.f32 1.0, %v1769
        %v1771 = vrcp.pop %v1231
        %v1772 = vmul.f32 %v1231, %v1771
        %v1773 = vsub.f32 1.0, %v1772
        %v1774 = vmul.f32 %v1771, %v1773
        %v1775 = vadd.f32 %v1771, %v1774
        %vm1776 = vweird.f32 %v1231
        %vm1777 = vweird.f32 %v1771
        %vm1778 = vmor %vm1776, %vm1777
        %v1779 = vsel %vm1778, %v1771, %v1775
        %v1780 = vand.u32 2147483647, %v1231
        %vm1781 = vcmp.eq.f32.partialorder %v1780, 8.507059e+37
        %v1782 = vand.u32 %v1231, 2147483648
        %v1783 = vor.u32 1.1754944e-38, %v1782
        %v1784 = vsel %vm1781, %v1783, %v1779
        %v1785 = vmul.f32 1.0, %v1784
        %v1786 = vrcp.pop %v1232
        %v1787 = vmul.f32 %v1232, %v1786
        %v1788 = vsub.f32 1.0, %v1787
        %v1789 = vmul.f32 %v1786, %v1788
        %v1790 = vadd.f32 %v1786, %v1789
        %vm1791 = vweird.f32 %v1232
        %vm1792 = vweird.f32 %v1786
        %vm1793 = vmor %vm1791, %vm1792
        %v1794 = vsel %vm1793, %v1786, %v1790
        %v1795 = vand.u32 2147483647, %v1232
        %vm1796 = vcmp.eq.f32.partialorder %v1795, 8.507059e+37
        %v1797 = vand.u32 %v1232, 2147483648
        %v1798 = vor.u32 1.1754944e-38, %v1797
        %v1799 = vsel %vm1796, %v1798, %v1794
        %v1800 = vmul.f32 1.0, %v1799
        %v1801 = vrcp.pop %v1233
        %v1802 = vmul.f32 %v1233, %v1801
        %v1803 = vsub.f32 1.0, %v1802
        %v1804 = vmul.f32 %v1801, %v1803
        %v1805 = vadd.f32 %v1801, %v1804
        %vm1806 = vweird.f32 %v1233
        %vm1807 = vweird.f32 %v1801
        %vm1808 = vmor %vm1806, %vm1807
        %v1809 = vsel %vm1808, %v1801, %v1805
        %v1810 = vand.u32 2147483647, %v1233
        %vm1811 = vcmp.eq.f32.partialorder %v1810, 8.507059e+37
        %v1812 = vand.u32 %v1233, 2147483648
        %v1813 = vor.u32 1.1754944e-38, %v1812
        %v1814 = vsel %vm1811, %v1813, %v1809
        %v1815 = vmul.f32 1.0, %v1814
        %v1816 = vrcp.pop %v1234
        %v1817 = vmul.f32 %v1234, %v1816
        %v1818 = vsub.f32 1.0, %v1817
        %v1819 = vmul.f32 %v1816, %v1818
        %v1820 = vadd.f32 %v1816, %v1819
        %vm1821 = vweird.f32 %v1234
        %vm1822 = vweird.f32 %v1816
        %vm1823 = vmor %vm1821, %vm1822
        %v1824 = vsel %vm1823, %v1816, %v1820
        %v1825 = vand.u32 2147483647, %v1234
        %vm1826 = vcmp.eq.f32.partialorder %v1825, 8.507059e+37
        %v1827 = vand.u32 %v1234, 2147483648
        %v1828 = vor.u32 1.1754944e-38, %v1827
        %v1829 = vsel %vm1826, %v1828, %v1824
        %v1830 = vmul.f32 1.0, %v1829
        %v1831 = vrcp.pop %v1235
        %v1832 = vmul.f32 %v1235, %v1831
        %v1833 = vsub.f32 1.0, %v1832
        %v1834 = vmul.f32 %v1831, %v1833
        %v1835 = vadd.f32 %v1831, %v1834
        %vm1836 = vweird.f32 %v1235
        %vm1837 = vweird.f32 %v1831
        %vm1838 = vmor %vm1836, %vm1837
        %v1839 = vsel %vm1838, %v1831, %v1835
        %v1840 = vand.u32 2147483647, %v1235
        %vm1841 = vcmp.eq.f32.partialorder %v1840, 8.507059e+37
        %v1842 = vand.u32 %v1235, 2147483648
        %v1843 = vor.u32 1.1754944e-38, %v1842
        %v1844 = vsel %vm1841, %v1843, %v1839
        %v1845 = vmul.f32 1.0, %v1844
        %v1846 = vrcp.pop %v1236
        %v1847 = vmul.f32 %v1236, %v1846
        %v1848 = vsub.f32 1.0, %v1847
        %v1849 = vmul.f32 %v1846, %v1848
        %v1850 = vadd.f32 %v1846, %v1849
        %vm1851 = vweird.f32 %v1236
        %vm1852 = vweird.f32 %v1846
        %vm1853 = vmor %vm1851, %vm1852
        %v1854 = vsel %vm1853, %v1846, %v1850
        %v1855 = vand.u32 2147483647, %v1236
        %vm1856 = vcmp.eq.f32.partialorder %v1855, 8.507059e+37
        %v1857 = vand.u32 %v1236, 2147483648
        %v1858 = vor.u32 1.1754944e-38, %v1857
        %v1859 = vsel %vm1856, %v1858, %v1854
        %v1860 = vmul.f32 1.0, %v1859
        %v1861 = vrcp.pop %v1237
        %v1862 = vmul.f32 %v1237, %v1861
        %v1863 = vsub.f32 1.0, %v1862
        %v1864 = vmul.f32 %v1861, %v1863
        %v1865 = vadd.f32 %v1861, %v1864
        %vm1866 = vweird.f32 %v1237
        %vm1867 = vweird.f32 %v1861
        %vm1868 = vmor %vm1866, %vm1867
        %v1869 = vsel %vm1868, %v1861, %v1865
        %v1870 = vand.u32 2147483647, %v1237
        %vm1871 = vcmp.eq.f32.partialorder %v1870, 8.507059e+37
        %v1872 = vand.u32 %v1237, 2147483648
        %v1873 = vor.u32 1.1754944e-38, %v1872
        %v1874 = vsel %vm1871, %v1873, %v1869
        %v1875 = vmul.f32 1.0, %v1874
        %v1876 = vrcp.pop %v1238
        %v1877 = vmul.f32 %v1238, %v1876
        %v1878 = vsub.f32 1.0, %v1877
        %v1879 = vmul.f32 %v1876, %v1878
        %v1880 = vadd.f32 %v1876, %v1879
        %vm1881 = vweird.f32 %v1238
        %vm1882 = vweird.f32 %v1876
        %vm1883 = vmor %vm1881, %vm1882
        %v1884 = vsel %vm1883, %v1876, %v1880
        %v1885 = vand.u32 2147483647, %v1238
        %vm1886 = vcmp.eq.f32.partialorder %v1885, 8.507059e+37
        %v1887 = vand.u32 %v1238, 2147483648
        %v1888 = vor.u32 1.1754944e-38, %v1887
        %v1889 = vsel %vm1886, %v1888, %v1884
        %v1890 = vmul.f32 1.0, %v1889
        %v1891 = vrcp.pop %v1239
        %v1892 = vmul.f32 %v1239, %v1891
        %v1893 = vsub.f32 1.0, %v1892
        %v1894 = vmul.f32 %v1891, %v1893
        %v1895 = vadd.f32 %v1891, %v1894
        %vm1896 = vweird.f32 %v1239
        %vm1897 = vweird.f32 %v1891
        %vm1898 = vmor %vm1896, %vm1897
        %v1899 = vsel %vm1898, %v1891, %v1895
        %v1900 = vand.u32 2147483647, %v1239
        %vm1901 = vcmp.eq.f32.partialorder %v1900, 8.507059e+37
        %v1902 = vand.u32 %v1239, 2147483648
        %v1903 = vor.u32 1.1754944e-38, %v1902
        %v1904 = vsel %vm1901, %v1903, %v1899
        %v1905 = vmul.f32 1.0, %v1904
        %v1906 = vrcp.pop %v1240
        %v1907 = vmul.f32 %v1240, %v1906
        %v1908 = vsub.f32 1.0, %v1907
        %v1909 = vmul.f32 %v1906, %v1908
        %v1910 = vadd.f32 %v1906, %v1909
        %vm1911 = vweird.f32 %v1240
        %vm1912 = vweird.f32 %v1906
        %vm1913 = vmor %vm1911, %vm1912
        %v1914 = vsel %vm1913, %v1906, %v1910
        %v1915 = vand.u32 2147483647, %v1240
        %vm1916 = vcmp.eq.f32.partialorder %v1915, 8.507059e+37
        %v1917 = vand.u32 %v1240, 2147483648
        %v1918 = vor.u32 1.1754944e-38, %v1917
        %v1919 = vsel %vm1916, %v1918, %v1914
        %v1920 = vmul.f32 1.0, %v1919
        %v1921 = vrcp.pop %v1241
        %v1922 = vmul.f32 %v1241, %v1921
        %v1923 = vsub.f32 1.0, %v1922
        %v1924 = vmul.f32 %v1921, %v1923
        %v1925 = vadd.f32 %v1921, %v1924
        %vm1926 = vweird.f32 %v1241
        %vm1927 = vweird.f32 %v1921
        %vm1928 = vmor %vm1926, %vm1927
        %v1929 = vsel %vm1928, %v1921, %v1925
        %v1930 = vand.u32 2147483647, %v1241
        %vm1931 = vcmp.eq.f32.partialorder %v1930, 8.507059e+37
        %v1932 = vand.u32 %v1241, 2147483648
        %v1933 = vor.u32 1.1754944e-38, %v1932
        %v1934 = vsel %vm1931, %v1933, %v1929
        %v1935 = vmul.f32 1.0, %v1934
        %v1936 = vrcp.pop %v1242
        %v1937 = vmul.f32 %v1242, %v1936
        %v1938 = vsub.f32 1.0, %v1937
        %v1939 = vmul.f32 %v1936, %v1938
        %v1940 = vadd.f32 %v1936, %v1939
        %vm1941 = vweird.f32 %v1242
        %vm1942 = vweird.f32 %v1936
        %vm1943 = vmor %vm1941, %vm1942
        %v1944 = vsel %vm1943, %v1936, %v1940
        %v1945 = vand.u32 2147483647, %v1242
        %vm1946 = vcmp.eq.f32.partialorder %v1945, 8.507059e+37
        %v1947 = vand.u32 %v1242, 2147483648
        %v1948 = vor.u32 1.1754944e-38, %v1947
        %v1949 = vsel %vm1946, %v1948, %v1944
        %v1950 = vmul.f32 1.0, %v1949
        %v1951 = vrcp.pop %v1243
        %v1952 = vmul.f32 %v1243, %v1951
        %v1953 = vsub.f32 1.0, %v1952
        %v1954 = vmul.f32 %v1951, %v1953
        %v1955 = vadd.f32 %v1951, %v1954
        %vm1956 = vweird.f32 %v1243
        %vm1957 = vweird.f32 %v1951
        %vm1958 = vmor %vm1956, %vm1957
        %v1959 = vsel %vm1958, %v1951, %v1955
        %v1960 = vand.u32 2147483647, %v1243
        %vm1961 = vcmp.eq.f32.partialorder %v1960, 8.507059e+37
        %v1962 = vand.u32 %v1243, 2147483648
        %v1963 = vor.u32 1.1754944e-38, %v1962
        %v1964 = vsel %vm1961, %v1963, %v1959
        %v1965 = vmul.f32 1.0, %v1964
        %v1966 = vrcp.pop %v1244
        %v1967 = vmul.f32 %v1244, %v1966
        %v1968 = vsub.f32 1.0, %v1967
        %v1969 = vmul.f32 %v1966, %v1968
        %v1970 = vadd.f32 %v1966, %v1969
        %vm1971 = vweird.f32 %v1244
        %vm1972 = vweird.f32 %v1966
        %vm1973 = vmor %vm1971, %vm1972
        %v1974 = vsel %vm1973, %v1966, %v1970
        %v1975 = vand.u32 2147483647, %v1244
        %vm1976 = vcmp.eq.f32.partialorder %v1975, 8.507059e+37
        %v1977 = vand.u32 %v1244, 2147483648
        %v1978 = vor.u32 1.1754944e-38, %v1977
        %v1979 = vsel %vm1976, %v1978, %v1974
        %v1980 = vmul.f32 1.0, %v1979
        %v1981 = vrcp.pop %v1245
        %v1982 = vmul.f32 %v1245, %v1981
        %v1983 = vsub.f32 1.0, %v1982
        %v1984 = vmul.f32 %v1981, %v1983
        %v1985 = vadd.f32 %v1981, %v1984
        %vm1986 = vweird.f32 %v1245
        %vm1987 = vweird.f32 %v1981
        %vm1988 = vmor %vm1986, %vm1987
        %v1989 = vsel %vm1988, %v1981, %v1985
        %v1990 = vand.u32 2147483647, %v1245
        %vm1991 = vcmp.eq.f32.partialorder %v1990, 8.507059e+37
        %v1992 = vand.u32 %v1245, 2147483648
        %v1993 = vor.u32 1.1754944e-38, %v1992
        %v1994 = vsel %vm1991, %v1993, %v1989
        %v1995 = vmul.f32 1.0, %v1994
        %v1996 = vrcp.pop %v1246
        %v1997 = vmul.f32 %v1246, %v1996
        %v1998 = vsub.f32 1.0, %v1997
        %v1999 = vmul.f32 %v1996, %v1998
        %v2000 = vadd.f32 %v1996, %v1999
        %vm2001 = vweird.f32 %v1246
        %vm2002 = vweird.f32 %v1996
        %vm2003 = vmor %vm2001, %vm2002
        %v2004 = vsel %vm2003, %v1996, %v2000
        %v2005 = vand.u32 2147483647, %v1246
        %vm2006 = vcmp.eq.f32.partialorder %v2005, 8.507059e+37
        %v2007 = vand.u32 %v1246, 2147483648
        %v2008 = vor.u32 1.1754944e-38, %v2007
        %v2009 = vsel %vm2006, %v2008, %v2004
        %v2010 = vmul.f32 1.0, %v2009
        %v2011 = vrcp.pop %v1247
        %v2012 = vmul.f32 %v1247, %v2011
        %v2013 = vsub.f32 1.0, %v2012
        %v2014 = vmul.f32 %v2011, %v2013
        %v2015 = vadd.f32 %v2011, %v2014
        %vm2016 = vweird.f32 %v1247
        %vm2017 = vweird.f32 %v2011
        %vm2018 = vmor %vm2016, %vm2017
        %v2019 = vsel %vm2018, %v2011, %v2015
        %v2020 = vand.u32 2147483647, %v1247
        %vm2021 = vcmp.eq.f32.partialorder %v2020, 8.507059e+37
        %v2022 = vand.u32 %v1247, 2147483648
        %v2023 = vor.u32 1.1754944e-38, %v2022
        %v2024 = vsel %vm2021, %v2023, %v2019
        %v2025 = vmul.f32 1.0, %v2024
        %v2026 = vrcp.pop %v1248
        %v2027 = vmul.f32 %v1248, %v2026
        %v2028 = vsub.f32 1.0, %v2027
        %v2029 = vmul.f32 %v2026, %v2028
        %v2030 = vadd.f32 %v2026, %v2029
        %vm2031 = vweird.f32 %v1248
        %vm2032 = vweird.f32 %v2026
        %vm2033 = vmor %vm2031, %vm2032
        %v2034 = vsel %vm2033, %v2026, %v2030
        %v2035 = vand.u32 2147483647, %v1248
        %vm2036 = vcmp.eq.f32.partialorder %v2035, 8.507059e+37
        %v2037 = vand.u32 %v1248, 2147483648
        %v2038 = vor.u32 1.1754944e-38, %v2037
        %v2039 = vsel %vm2036, %v2038, %v2034
        %v2040 = vmul.f32 1.0, %v2039
        %v2041 = vrcp.pop %v1249
        %v2042 = vmul.f32 %v1249, %v2041
        %v2043 = vsub.f32 1.0, %v2042
        %v2044 = vmul.f32 %v2041, %v2043
        %v2045 = vadd.f32 %v2041, %v2044
        %vm2046 = vweird.f32 %v1249
        %vm2047 = vweird.f32 %v2041
        %vm2048 = vmor %vm2046, %vm2047
        %v2049 = vsel %vm2048, %v2041, %v2045
        %v2050 = vand.u32 2147483647, %v1249
        %vm2051 = vcmp.eq.f32.partialorder %v2050, 8.507059e+37
        %v2052 = vand.u32 %v1249, 2147483648
        %v2053 = vor.u32 1.1754944e-38, %v2052
        %v2054 = vsel %vm2051, %v2053, %v2049
        %v2055 = vmul.f32 1.0, %v2054
        %v2056 = vrcp.pop %v1250
        %v2057 = vmul.f32 %v1250, %v2056
        %v2058 = vsub.f32 1.0, %v2057
        %v2059 = vmul.f32 %v2056, %v2058
        %v2060 = vadd.f32 %v2056, %v2059
        %vm2061 = vweird.f32 %v1250
        %vm2062 = vweird.f32 %v2056
        %vm2063 = vmor %vm2061, %vm2062
        %v2064 = vsel %vm2063, %v2056, %v2060
        %v2065 = vand.u32 2147483647, %v1250
        %vm2066 = vcmp.eq.f32.partialorder %v2065, 8.507059e+37
        %v2067 = vand.u32 %v1250, 2147483648
        %v2068 = vor.u32 1.1754944e-38, %v2067
        %v2069 = vsel %vm2066, %v2068, %v2064
        %v2070 = vmul.f32 1.0, %v2069
        %v2071 = vrcp.pop %v1251
        %v2072 = vmul.f32 %v1251, %v2071
        %v2073 = vsub.f32 1.0, %v2072
        %v2074 = vmul.f32 %v2071, %v2073
        %v2075 = vadd.f32 %v2071, %v2074
        %vm2076 = vweird.f32 %v1251
        %vm2077 = vweird.f32 %v2071
        %vm2078 = vmor %vm2076, %vm2077
        %v2079 = vsel %vm2078, %v2071, %v2075
        %v2080 = vand.u32 2147483647, %v1251
        %vm2081 = vcmp.eq.f32.partialorder %v2080, 8.507059e+37
        %v2082 = vand.u32 %v1251, 2147483648
        %v2083 = vor.u32 1.1754944e-38, %v2082
        %v2084 = vsel %vm2081, %v2083, %v2079
        %v2085 = vmul.f32 1.0, %v2084
        %v2086 = vrcp.pop %v1252
        %v2087 = vmul.f32 %v1252, %v2086
        %v2088 = vsub.f32 1.0, %v2087
        %v2089 = vmul.f32 %v2086, %v2088
        %v2090 = vadd.f32 %v2086, %v2089
        %vm2091 = vweird.f32 %v1252
        %vm2092 = vweird.f32 %v2086
        %vm2093 = vmor %vm2091, %vm2092
        %v2094 = vsel %vm2093, %v2086, %v2090
        %v2095 = vand.u32 2147483647, %v1252
        %vm2096 = vcmp.eq.f32.partialorder %v2095, 8.507059e+37
        %v2097 = vand.u32 %v1252, 2147483648
        %v2098 = vor.u32 1.1754944e-38, %v2097
        %v2099 = vsel %vm2096, %v2098, %v2094
        %v2100 = vmul.f32 1.0, %v2099
        %v2101 = vrcp.pop %v1253
        %v2102 = vmul.f32 %v1253, %v2101
        %v2103 = vsub.f32 1.0, %v2102
        %v2104 = vmul.f32 %v2101, %v2103
        %v2105 = vadd.f32 %v2101, %v2104
        %vm2106 = vweird.f32 %v1253
        %vm2107 = vweird.f32 %v2101
        %vm2108 = vmor %vm2106, %vm2107
        %v2109 = vsel %vm2108, %v2101, %v2105
        %v2110 = vand.u32 2147483647, %v1253
        %vm2111 = vcmp.eq.f32.partialorder %v2110, 8.507059e+37
        %v2112 = vand.u32 %v1253, 2147483648
        %v2113 = vor.u32 1.1754944e-38, %v2112
        %v2114 = vsel %vm2111, %v2113, %v2109
        %v2115 = vmul.f32 1.0, %v2114
        %v2116 = vrcp.pop %v1254
        %v2117 = vmul.f32 %v1254, %v2116
        %v2118 = vsub.f32 1.0, %v2117
        %v2119 = vmul.f32 %v2116, %v2118
        %v2120 = vadd.f32 %v2116, %v2119
        %vm2121 = vweird.f32 %v1254
        %vm2122 = vweird.f32 %v2116
        %vm2123 = vmor %vm2121, %vm2122
        %v2124 = vsel %vm2123, %v2116, %v2120
        %v2125 = vand.u32 2147483647, %v1254
        %vm2126 = vcmp.eq.f32.partialorder %v2125, 8.507059e+37
        %v2127 = vand.u32 %v1254, 2147483648
        %v2128 = vor.u32 1.1754944e-38, %v2127
        %v2129 = vsel %vm2126, %v2128, %v2124
        %v2130 = vmul.f32 1.0, %v2129
        %v2131 = vrcp.pop %v1255
        %v2132 = vmul.f32 %v1255, %v2131
        %v2133 = vsub.f32 1.0, %v2132
        %v2134 = vmul.f32 %v2131, %v2133
        %v2135 = vadd.f32 %v2131, %v2134
        %vm2136 = vweird.f32 %v1255
        %vm2137 = vweird.f32 %v2131
        %vm2138 = vmor %vm2136, %vm2137
        %v2139 = vsel %vm2138, %v2131, %v2135
        %v2140 = vand.u32 2147483647, %v1255
        %vm2141 = vcmp.eq.f32.partialorder %v2140, 8.507059e+37
        %v2142 = vand.u32 %v1255, 2147483648
        %v2143 = vor.u32 1.1754944e-38, %v2142
        %v2144 = vsel %vm2141, %v2143, %v2139
        %v2145 = vmul.f32 1.0, %v2144
        %v2146 = vrcp.pop %v1256
        %v2147 = vmul.f32 %v1256, %v2146
        %v2148 = vsub.f32 1.0, %v2147
        %v2149 = vmul.f32 %v2146, %v2148
        %v2150 = vadd.f32 %v2146, %v2149
        %vm2151 = vweird.f32 %v1256
        %vm2152 = vweird.f32 %v2146
        %vm2153 = vmor %vm2151, %vm2152
        %v2154 = vsel %vm2153, %v2146, %v2150
        %v2155 = vand.u32 2147483647, %v1256
        %vm2156 = vcmp.eq.f32.partialorder %v2155, 8.507059e+37
        %v2157 = vand.u32 %v1256, 2147483648
        %v2158 = vor.u32 1.1754944e-38, %v2157
        %v2159 = vsel %vm2156, %v2158, %v2154
        %v2160 = vmul.f32 1.0, %v2159
        %v2161 = vrcp.pop %v1257
        %v2162 = vmul.f32 %v1257, %v2161
        %v2163 = vsub.f32 1.0, %v2162
        %v2164 = vmul.f32 %v2161, %v2163
        %v2165 = vadd.f32 %v2161, %v2164
        %vm2166 = vweird.f32 %v1257
        %vm2167 = vweird.f32 %v2161
        %vm2168 = vmor %vm2166, %vm2167
        %v2169 = vsel %vm2168, %v2161, %v2165
        %v2170 = vand.u32 2147483647, %v1257
        %vm2171 = vcmp.eq.f32.partialorder %v2170, 8.507059e+37
        %v2172 = vand.u32 %v1257, 2147483648
        %v2173 = vor.u32 1.1754944e-38, %v2172
        %v2174 = vsel %vm2171, %v2173, %v2169
        %v2175 = vmul.f32 1.0, %v2174
        %v2176 = vrcp.pop %v1258
        %v2177 = vmul.f32 %v1258, %v2176
        %v2178 = vsub.f32 1.0, %v2177
        %v2179 = vmul.f32 %v2176, %v2178
        %v2180 = vadd.f32 %v2176, %v2179
        %vm2181 = vweird.f32 %v1258
        %vm2182 = vweird.f32 %v2176
        %vm2183 = vmor %vm2181, %vm2182
        %v2184 = vsel %vm2183, %v2176, %v2180
        %v2185 = vand.u32 2147483647, %v1258
        %vm2186 = vcmp.eq.f32.partialorder %v2185, 8.507059e+37
        %v2187 = vand.u32 %v1258, 2147483648
        %v2188 = vor.u32 1.1754944e-38, %v2187
        %v2189 = vsel %vm2186, %v2188, %v2184
        %v2190 = vmul.f32 1.0, %v2189
        %v2191 = vrcp.pop %v1259
        %v2192 = vmul.f32 %v1259, %v2191
        %v2193 = vsub.f32 1.0, %v2192
        %v2194 = vmul.f32 %v2191, %v2193
        %v2195 = vadd.f32 %v2191, %v2194
        %vm2196 = vweird.f32 %v1259
        %vm2197 = vweird.f32 %v2191
        %vm2198 = vmor %vm2196, %vm2197
        %v2199 = vsel %vm2198, %v2191, %v2195
        %v2200 = vand.u32 2147483647, %v1259
        %vm2201 = vcmp.eq.f32.partialorder %v2200, 8.507059e+37
        %v2202 = vand.u32 %v1259, 2147483648
        %v2203 = vor.u32 1.1754944e-38, %v2202
        %v2204 = vsel %vm2201, %v2203, %v2199
        %v2205 = vmul.f32 1.0, %v2204
        %v2206 = vrcp.pop %v1260
        %v2207 = vmul.f32 %v1260, %v2206
        %v2208 = vsub.f32 1.0, %v2207
        %v2209 = vmul.f32 %v2206, %v2208
        %v2210 = vadd.f32 %v2206, %v2209
        %vm2211 = vweird.f32 %v1260
        %vm2212 = vweird.f32 %v2206
        %vm2213 = vmor %vm2211, %vm2212
        %v2214 = vsel %vm2213, %v2206, %v2210
        %v2215 = vand.u32 2147483647, %v1260
        %vm2216 = vcmp.eq.f32.partialorder %v2215, 8.507059e+37
        %v2217 = vand.u32 %v1260, 2147483648
        %v2218 = vor.u32 1.1754944e-38, %v2217
        %v2219 = vsel %vm2216, %v2218, %v2214
        %v2220 = vmul.f32 1.0, %v2219
        %v2221 = vmul.f32 %v819, %v1275
        %v2222 = vmul.f32 %v868, %v1290
        %v2223 = vmul.f32 %v917, %v1305
        %v2224 = vmul.f32 %v966, %v1320
        %v2225 = vmul.f32 %v821, %v1335
        %v2226 = vmul.f32 %v870, %v1350
        %v2227 = vmul.f32 %v919, %v1365
        %v2228 = vmul.f32 %v968, %v1380
        %v2229 = vmul.f32 %v824, %v1395
        %v2230 = vmul.f32 %v873, %v1410
        %v2231 = vmul.f32 %v922, %v1425
        %v2232 = vmul.f32 %v971, %v1440
        %v2233 = vmul.f32 %v826, %v1455
        %v2234 = vmul.f32 %v875, %v1470
        %v2235 = vmul.f32 %v924, %v1485
        %v2236 = vmul.f32 %v973, %v1500
        %v2237 = vmul.f32 %v829, %v1515
        %v2238 = vmul.f32 %v878, %v1530
        %v2239 = vmul.f32 %v927, %v1545
        %v2240 = vmul.f32 %v976, %v1560
        %v2241 = vmul.f32 %v831, %v1575
        %v2242 = vmul.f32 %v880, %v1590
        %v2243 = vmul.f32 %v929, %v1605
        %v2244 = vmul.f32 %v978, %v1620
        %v2245 = vmul.f32 %v834, %v1635
        %v2246 = vmul.f32 %v883, %v1650
        %v2247 = vmul.f32 %v932, %v1665
        %v2248 = vmul.f32 %v981, %v1680
        %v2249 = vmul.f32 %v836, %v1695
        %v2250 = vmul.f32 %v885, %v1710
        %v2251 = vmul.f32 %v934, %v1725
        %v2252 = vmul.f32 %v983, %v1740
        %v2253 = vmul.f32 %v839, %v1755
        %v2254 = vmul.f32 %v888, %v1770
        %v2255 = vmul.f32 %v937, %v1785
        %v2256 = vmul.f32 %v986, %v1800
        %v2257 = vmul.f32 %v841, %v1815
        %v2258 = vmul.f32 %v890, %v1830
        %v2259 = vmul.f32 %v939, %v1845
        %v2260 = vmul.f32 %v988, %v1860
        %v2261 = vmul.f32 %v844, %v1875
        %v2262 = vmul.f32 %v893, %v1890
        %v2263 = vmul.f32 %v942, %v1905
        %v2264 = vmul.f32 %v991, %v1920
        %v2265 = vmul.f32 %v846, %v1935
        %v2266 = vmul.f32 %v895, %v1950
        %v2267 = vmul.f32 %v944, %v1965
        %v2268 = vmul.f32 %v993, %v1980
        %v2269 = vmul.f32 %v849, %v1995
        %v2270 = vmul.f32 %v898, %v2010
        %v2271 = vmul.f32 %v947, %v2025
        %v2272 = vmul.f32 %v996, %v2040
        %v2273 = vmul.f32 %v851, %v2055
        %v2274 = vmul.f32 %v900, %v2070
        %v2275 = vmul.f32 %v949, %v2085
        %v2276 = vmul.f32 %v998, %v2100
        %v2277 = vmul.f32 %v854, %v2115
        %v2278 = vmul.f32 %v903, %v2130
        %v2279 = vmul.f32 %v952, %v2145
        %v2280 = vmul.f32 %v1001, %v2160
        %v2281 = vmul.f32 %v856, %v2175
        %v2282 = vmul.f32 %v905, %v2190
        %v2283 = vmul.f32 %v954, %v2205
        %v2284 = vmul.f32 %v1003, %v2220
        %v2285 = vpack.c.bf16 %v2225, %v2221
        %v2286 = vpack.c.bf16 %v2226, %v2222
        %v2287 = vpack.c.bf16 %v2227, %v2223
        %v2288 = vpack.c.bf16 %v2228, %v2224
        %v2289 = vpack.c.bf16 %v2233, %v2229
        %v2290 = vpack.c.bf16 %v2234, %v2230
        %v2291 = vpack.c.bf16 %v2235, %v2231
        %v2292 = vpack.c.bf16 %v2236, %v2232
        %v2293 = vpack.c.bf16 %v2241, %v2237
        %v2294 = vpack.c.bf16 %v2242, %v2238
        %v2295 = vpack.c.bf16 %v2243, %v2239
        %v2296 = vpack.c.bf16 %v2244, %v2240
        %v2297 = vpack.c.bf16 %v2249, %v2245
        %v2298 = vpack.c.bf16 %v2250, %v2246
        %v2299 = vpack.c.bf16 %v2251, %v2247
        %v2300 = vpack.c.bf16 %v2252, %v2248
        %v2301 = vpack.c.bf16 %v2257, %v2253
        %v2302 = vpack.c.bf16 %v2258, %v2254
        %v2303 = vpack.c.bf16 %v2259, %v2255
        %v2304 = vpack.c.bf16 %v2260, %v2256
        %v2305 = vpack.c.bf16 %v2265, %v2261
        %v2306 = vpack.c.bf16 %v2266, %v2262
        %v2307 = vpack.c.bf16 %v2267, %v2263
        %v2308 = vpack.c.bf16 %v2268, %v2264
        %v2309 = vpack.c.bf16 %v2273, %v2269
        %v2310 = vpack.c.bf16 %v2274, %v2270
        %v2311 = vpack.c.bf16 %v2275, %v2271
        %v2312 = vpack.c.bf16 %v2276, %v2272
        %v2313 = vpack.c.bf16 %v2281, %v2277
        %v2314 = vpack.c.bf16 %v2282, %v2278
        %v2315 = vpack.c.bf16 %v2283, %v2279
        %v2316 = vpack.c.bf16 %v2284, %v2280
        %v2317 = vld [vmem:[#allocation2] sm:$0xf]
        %v2318 = vld [vmem:[#allocation2 + $0x4] sm:$0xf]
        %v2319 = vld [vmem:[#allocation2 + $0x8] sm:$0xf]
        %v2320 = vld [vmem:[#allocation2 + $0xc] sm:$0xf]
        %v2321 = vld [vmem:[#allocation2 + $0x10] sm:$0xf]
        %v2322 = vld [vmem:[#allocation2 + $0x14] sm:$0xf]
        %v2323 = vld [vmem:[#allocation2 + $0x18] sm:$0xf]
        %v2324 = vld [vmem:[#allocation2 + $0x1c] sm:$0xf]
        %v2325 = vld [vmem:[#allocation2 + $0x20] sm:$0xf]
        %v2326 = vld [vmem:[#allocation2 + $0x24] sm:$0xf]
        %v2327 = vld [vmem:[#allocation2 + $0x28] sm:$0xf]
        %v2328 = vld [vmem:[#allocation2 + $0x2c] sm:$0xf]
        %v2329 = vld [vmem:[#allocation2 + $0x30] sm:$0xf]
        %v2330 = vld [vmem:[#allocation2 + $0x34] sm:$0xf]
        %v2331 = vld [vmem:[#allocation2 + $0x38] sm:$0xf]
        %v2332 = vld [vmem:[#allocation2 + $0x3c] sm:$0xf]
        %v2333 = vld [vmem:[#allocation2 + $0x40] sm:$0xf]
        %v2334 = vld [vmem:[#allocation2 + $0x44] sm:$0xf]
        %v2335 = vld [vmem:[#allocation2 + $0x48] sm:$0xf]
        %v2336 = vld [vmem:[#allocation2 + $0x4c] sm:$0xf]
        %v2337 = vld [vmem:[#allocation2 + $0x50] sm:$0xf]
        %v2338 = vld [vmem:[#allocation2 + $0x54] sm:$0xf]
        %v2339 = vld [vmem:[#allocation2 + $0x58] sm:$0xf]
        %v2340 = vld [vmem:[#allocation2 + $0x5c] sm:$0xf]
        %v2341 = vld [vmem:[#allocation2 + $0x60] sm:$0xf]
        %v2342 = vld [vmem:[#allocation2 + $0x64] sm:$0xf]
        %v2343 = vld [vmem:[#allocation2 + $0x68] sm:$0xf]
        %v2344 = vld [vmem:[#allocation2 + $0x6c] sm:$0xf]
        %v2345 = vld [vmem:[#allocation2 + $0x70] sm:$0xf]
        %v2346 = vld [vmem:[#allocation2 + $0x74] sm:$0xf]
        %v2347 = vld [vmem:[#allocation2 + $0x78] sm:$0xf]
        %v2348 = vld [vmem:[#allocation2 + $0x7c] sm:$0xf]
        %v2349 = vld [vmem:[#allocation2 + $0x80] sm:$0xf]
        %v2350 = vld [vmem:[#allocation2 + $0x84] sm:$0xf]
        %v2351 = vld [vmem:[#allocation2 + $0x88] sm:$0xf]
        %v2352 = vld [vmem:[#allocation2 + $0x8c] sm:$0xf]
        %v2353 = vld [vmem:[#allocation2 + $0x90] sm:$0xf]
        %v2354 = vld [vmem:[#allocation2 + $0x94] sm:$0xf]
        %v2355 = vld [vmem:[#allocation2 + $0x98] sm:$0xf]
        %v2356 = vld [vmem:[#allocation2 + $0x9c] sm:$0xf]
        %v2357 = vld [vmem:[#allocation2 + $0xa0] sm:$0xf]
        %v2358 = vld [vmem:[#allocation2 + $0xa4] sm:$0xf]
        %v2359 = vld [vmem:[#allocation2 + $0xa8] sm:$0xf]
        %v2360 = vld [vmem:[#allocation2 + $0xac] sm:$0xf]
        %v2361 = vld [vmem:[#allocation2 + $0xb0] sm:$0xf]
        %v2362 = vld [vmem:[#allocation2 + $0xb4] sm:$0xf]
        %v2363 = vld [vmem:[#allocation2 + $0xb8] sm:$0xf]
        %v2364 = vld [vmem:[#allocation2 + $0xbc] sm:$0xf]
        %v2365 = vld [vmem:[#allocation2 + $0xc0] sm:$0xf]
        %v2366 = vld [vmem:[#allocation2 + $0xc4] sm:$0xf]
        %v2367 = vld [vmem:[#allocation2 + $0xc8] sm:$0xf]
        %v2368 = vld [vmem:[#allocation2 + $0xcc] sm:$0xf]
        %v2369 = vld [vmem:[#allocation2 + $0xd0] sm:$0xf]
        %v2370 = vld [vmem:[#allocation2 + $0xd4] sm:$0xf]
        %v2371 = vld [vmem:[#allocation2 + $0xd8] sm:$0xf]
        %v2372 = vld [vmem:[#allocation2 + $0xdc] sm:$0xf]
        %v2373 = vld [vmem:[#allocation2 + $0xe0] sm:$0xf]
        %v2374 = vld [vmem:[#allocation2 + $0xe4] sm:$0xf]
        %v2375 = vld [vmem:[#allocation2 + $0xe8] sm:$0xf]
        %v2376 = vld [vmem:[#allocation2 + $0xec] sm:$0xf]
        %v2377 = vld [vmem:[#allocation2 + $0xf0] sm:$0xf]
        %v2378 = vld [vmem:[#allocation2 + $0xf4] sm:$0xf]
        %v2379 = vld [vmem:[#allocation2 + $0xf8] sm:$0xf]
        %v2380 = vld [vmem:[#allocation2 + $0xfc] sm:$0xf]
        %v2381 = vld [vmem:[%s3 + $0x4] sm:$0x1]
        %v2383 = vperm.slane %v2381, 0
        %v2449 = vunpack.c.l.b16 %v2317
        %v2450 = vunpack.c.l.b16 %v2318
        %v2451 = vunpack.c.l.b16 %v2319
        %v2452 = vunpack.c.l.b16 %v2320
        %v2453 = vunpack.c.l.b16 %v2321
        %v2454 = vunpack.c.l.b16 %v2322
        %v2455 = vunpack.c.l.b16 %v2323
        %v2456 = vunpack.c.l.b16 %v2324
        %v2457 = vunpack.c.l.b16 %v2325
        %v2458 = vunpack.c.l.b16 %v2326
        %v2459 = vunpack.c.l.b16 %v2327
        %v2460 = vunpack.c.l.b16 %v2328
        %v2461 = vunpack.c.l.b16 %v2329
        %v2462 = vunpack.c.l.b16 %v2330
        %v2463 = vunpack.c.l.b16 %v2331
        %v2464 = vunpack.c.l.b16 %v2332
        %v2465 = vunpack.c.l.b16 %v2333
        %v2466 = vunpack.c.l.b16 %v2334
        %v2467 = vunpack.c.l.b16 %v2335
        %v2468 = vunpack.c.l.b16 %v2336
        %v2469 = vunpack.c.l.b16 %v2337
        %v2470 = vunpack.c.l.b16 %v2338
        %v2471 = vunpack.c.l.b16 %v2339
        %v2472 = vunpack.c.l.b16 %v2340
        %v2473 = vunpack.c.l.b16 %v2341
        %v2474 = vunpack.c.l.b16 %v2342
        %v2475 = vunpack.c.l.b16 %v2343
        %v2476 = vunpack.c.l.b16 %v2344
        %v2477 = vunpack.c.l.b16 %v2345
        %v2478 = vunpack.c.l.b16 %v2346
        %v2479 = vunpack.c.l.b16 %v2347
        %v2480 = vunpack.c.l.b16 %v2348
        %v2481 = vunpack.c.l.b16 %v2349
        %v2482 = vunpack.c.l.b16 %v2350
        %v2483 = vunpack.c.l.b16 %v2351
        %v2484 = vunpack.c.l.b16 %v2352
        %v2485 = vunpack.c.l.b16 %v2353
        %v2486 = vunpack.c.l.b16 %v2354
        %v2487 = vunpack.c.l.b16 %v2355
        %v2488 = vunpack.c.l.b16 %v2356
        %v2489 = vunpack.c.l.b16 %v2357
        %v2490 = vunpack.c.l.b16 %v2358
        %v2491 = vunpack.c.l.b16 %v2359
        %v2492 = vunpack.c.l.b16 %v2360
        %v2493 = vunpack.c.l.b16 %v2361
        %v2494 = vunpack.c.l.b16 %v2362
        %v2495 = vunpack.c.l.b16 %v2363
        %v2496 = vunpack.c.l.b16 %v2364
        %v2497 = vunpack.c.l.b16 %v2365
        %v2498 = vunpack.c.l.b16 %v2366
        %v2499 = vunpack.c.l.b16 %v2367
        %v2500 = vunpack.c.l.b16 %v2368
        %v2501 = vunpack.c.l.b16 %v2369
        %v2502 = vunpack.c.l.b16 %v2370
        %v2503 = vunpack.c.l.b16 %v2371
        %v2504 = vunpack.c.l.b16 %v2372
        %v2505 = vunpack.c.l.b16 %v2373
        %v2506 = vunpack.c.l.b16 %v2374
        %v2507 = vunpack.c.l.b16 %v2375
        %v2508 = vunpack.c.l.b16 %v2376
        %v2509 = vunpack.c.l.b16 %v2377
        %v2510 = vunpack.c.l.b16 %v2378
        %v2511 = vunpack.c.l.b16 %v2379
        %v2512 = vunpack.c.l.b16 %v2380
        %v2513 = vpack.c.b16 %v2450, %v2449
        %v2514 = vpack.c.b16 %v2452, %v2451
        %v2515 = vpack.c.b16 %v2454, %v2453
        %v2516 = vpack.c.b16 %v2456, %v2455
        %v2517 = vpack.c.b16 %v2458, %v2457
        %v2518 = vpack.c.b16 %v2460, %v2459
        %v2519 = vpack.c.b16 %v2462, %v2461
        %v2520 = vpack.c.b16 %v2464, %v2463
        %v2521 = vpack.c.b16 %v2466, %v2465
        %v2522 = vpack.c.b16 %v2468, %v2467
        %v2523 = vpack.c.b16 %v2470, %v2469
        %v2524 = vpack.c.b16 %v2472, %v2471
        %v2525 = vpack.c.b16 %v2474, %v2473
        %v2526 = vpack.c.b16 %v2476, %v2475
        %v2527 = vpack.c.b16 %v2478, %v2477
        %v2528 = vpack.c.b16 %v2480, %v2479
        %v2529 = vpack.c.b16 %v2482, %v2481
        %v2530 = vpack.c.b16 %v2484, %v2483
        %v2531 = vpack.c.b16 %v2486, %v2485
        %v2532 = vpack.c.b16 %v2488, %v2487
        %v2533 = vpack.c.b16 %v2490, %v2489
        %v2534 = vpack.c.b16 %v2492, %v2491
        %v2535 = vpack.c.b16 %v2494, %v2493
        %v2536 = vpack.c.b16 %v2496, %v2495
        %v2537 = vpack.c.b16 %v2498, %v2497
        %v2538 = vpack.c.b16 %v2500, %v2499
        %v2539 = vpack.c.b16 %v2502, %v2501
        %v2540 = vpack.c.b16 %v2504, %v2503
        %v2541 = vpack.c.b16 %v2506, %v2505
        %v2542 = vpack.c.b16 %v2508, %v2507
        %v2543 = vpack.c.b16 %v2510, %v2509
        %v2544 = vpack.c.b16 %v2512, %v2511
        %2577 = vmatpush.bf16.msra.mxu0 %v2520
        %2578 = vmatpush.bf16.msra.mxu0 %v2519
        %2579 = vmatpush.bf16.msra.mxu0 %v2518
        %2580 = vmatpush.bf16.msra.mxu0 %v2517
        %2581 = vmatpush.bf16.msra.mxu0 %v2516
        %2582 = vmatpush.bf16.msra.mxu0 %v2515
        %2583 = vmatpush.bf16.msra.mxu0 %v2514
        %2584 = vmatpush.bf16.msra.mxu0 %v2513
        %2585 = vmatmul.bf16.gmra.mxu0 %v2285
        %v2586 = vpop.f32.mrf.mxu0
        %v2587 = vadd.f32 %v2383, %v2586
        %v2588 = vpop.f32.mrf.mxu0
        %v2589 = vadd.f32 %v2383, %v2588
        %2590 = vmatmul.bf16.gmra.mxu0 %v2289
        %v2591 = vpop.f32.mrf.mxu0
        %v2592 = vadd.f32 %v2383, %v2591
        %v2593 = vpop.f32.mrf.mxu0
        %v2594 = vadd.f32 %v2383, %v2593
        %2595 = vmatmul.bf16.gmra.mxu0 %v2293
        %v2596 = vpop.f32.mrf.mxu0
        %v2597 = vadd.f32 %v2383, %v2596
        %v2598 = vpop.f32.mrf.mxu0
        %v2599 = vadd.f32 %v2383, %v2598
        %2600 = vmatmul.bf16.gmra.mxu0 %v2297
        %v2601 = vpop.f32.mrf.mxu0
        %v2602 = vadd.f32 %v2383, %v2601
        %v2603 = vpop.f32.mrf.mxu0
        %v2604 = vadd.f32 %v2383, %v2603
        %2605 = vmatmul.bf16.gmra.mxu0 %v2301
        %v2606 = vpop.f32.mrf.mxu0
        %v2607 = vadd.f32 %v2383, %v2606
        %v2608 = vpop.f32.mrf.mxu0
        %v2609 = vadd.f32 %v2383, %v2608
        %2610 = vmatmul.bf16.gmra.mxu0 %v2305
        %v2611 = vpop.f32.mrf.mxu0
        %v2612 = vadd.f32 %v2383, %v2611
        %v2613 = vpop.f32.mrf.mxu0
        %v2614 = vadd.f32 %v2383, %v2613
        %2615 = vmatmul.bf16.gmra.mxu0 %v2309
        %v2616 = vpop.f32.mrf.mxu0
        %v2617 = vadd.f32 %v2383, %v2616
        %v2618 = vpop.f32.mrf.mxu0
        %v2619 = vadd.f32 %v2383, %v2618
        %2620 = vmatmul.bf16.gmra.mxu0 %v2313
        %v2621 = vpop.f32.mrf.mxu0
        %v2622 = vadd.f32 %v2383, %v2621
        %v2623 = vpop.f32.mrf.mxu0
        %v2624 = vadd.f32 %v2383, %v2623
        %2625 = vdwg.mxu0
        %2626 = vmatpush.bf16.msra.mxu0 %v2528
        %2627 = vmatpush.bf16.msra.mxu0 %v2527
        %2628 = vmatpush.bf16.msra.mxu0 %v2526
        %2629 = vmatpush.bf16.msra.mxu0 %v2525
        %2630 = vmatpush.bf16.msra.mxu0 %v2524
        %2631 = vmatpush.bf16.msra.mxu0 %v2523
        %2632 = vmatpush.bf16.msra.mxu0 %v2522
        %2633 = vmatpush.bf16.msra.mxu0 %v2521
        %2634 = vmatmul.bf16.gmra.mxu0 %v2286
        %v2635 = vpop.f32.mrf.mxu0
        %v2636 = vadd.f32 %v2587, %v2635
        %v2637 = vpop.f32.mrf.mxu0
        %v2638 = vadd.f32 %v2589, %v2637
        %2639 = vmatmul.bf16.gmra.mxu0 %v2290
        %v2640 = vpop.f32.mrf.mxu0
        %v2641 = vadd.f32 %v2592, %v2640
        %v2642 = vpop.f32.mrf.mxu0
        %v2643 = vadd.f32 %v2594, %v2642
        %2644 = vmatmul.bf16.gmra.mxu0 %v2294
        %v2645 = vpop.f32.mrf.mxu0
        %v2646 = vadd.f32 %v2597, %v2645
        %v2647 = vpop.f32.mrf.mxu0
        %v2648 = vadd.f32 %v2599, %v2647
        %2649 = vmatmul.bf16.gmra.mxu0 %v2298
        %v2650 = vpop.f32.mrf.mxu0
        %v2651 = vadd.f32 %v2602, %v2650
        %v2652 = vpop.f32.mrf.mxu0
        %v2653 = vadd.f32 %v2604, %v2652
        %2654 = vmatmul.bf16.gmra.mxu0 %v2302
        %v2655 = vpop.f32.mrf.mxu0
        %v2656 = vadd.f32 %v2607, %v2655
        %v2657 = vpop.f32.mrf.mxu0
        %v2658 = vadd.f32 %v2609, %v2657
        %2659 = vmatmul.bf16.gmra.mxu0 %v2306
        %v2660 = vpop.f32.mrf.mxu0
        %v2661 = vadd.f32 %v2612, %v2660
        %v2662 = vpop.f32.mrf.mxu0
        %v2663 = vadd.f32 %v2614, %v2662
        %2664 = vmatmul.bf16.gmra.mxu0 %v2310
        %v2665 = vpop.f32.mrf.mxu0
        %v2666 = vadd.f32 %v2617, %v2665
        %v2667 = vpop.f32.mrf.mxu0
        %v2668 = vadd.f32 %v2619, %v2667
        %2669 = vmatmul.bf16.gmra.mxu0 %v2314
        %v2670 = vpop.f32.mrf.mxu0
        %v2671 = vadd.f32 %v2622, %v2670
        %v2672 = vpop.f32.mrf.mxu0
        %v2673 = vadd.f32 %v2624, %v2672
        %2674 = vdwg.mxu0
        %2675 = vmatpush.bf16.msra.mxu0 %v2536
        %2676 = vmatpush.bf16.msra.mxu0 %v2535
        %2677 = vmatpush.bf16.msra.mxu0 %v2534
        %2678 = vmatpush.bf16.msra.mxu0 %v2533
        %2679 = vmatpush.bf16.msra.mxu0 %v2532
        %2680 = vmatpush.bf16.msra.mxu0 %v2531
        %2681 = vmatpush.bf16.msra.mxu0 %v2530
        %2682 = vmatpush.bf16.msra.mxu0 %v2529
        %2683 = vmatmul.bf16.gmra.mxu0 %v2287
        %v2684 = vpop.f32.mrf.mxu0
        %v2685 = vadd.f32 %v2636, %v2684
        %v2686 = vpop.f32.mrf.mxu0
        %v2687 = vadd.f32 %v2638, %v2686
        %2688 = vmatmul.bf16.gmra.mxu0 %v2291
        %v2689 = vpop.f32.mrf.mxu0
        %v2690 = vadd.f32 %v2641, %v2689
        %v2691 = vpop.f32.mrf.mxu0
        %v2692 = vadd.f32 %v2643, %v2691
        %2693 = vmatmul.bf16.gmra.mxu0 %v2295
        %v2694 = vpop.f32.mrf.mxu0
        %v2695 = vadd.f32 %v2646, %v2694
        %v2696 = vpop.f32.mrf.mxu0
        %v2697 = vadd.f32 %v2648, %v2696
        %2698 = vmatmul.bf16.gmra.mxu0 %v2299
        %v2699 = vpop.f32.mrf.mxu0
        %v2700 = vadd.f32 %v2651, %v2699
        %v2701 = vpop.f32.mrf.mxu0
        %v2702 = vadd.f32 %v2653, %v2701
        %2703 = vmatmul.bf16.gmra.mxu0 %v2303
        %v2704 = vpop.f32.mrf.mxu0
        %v2705 = vadd.f32 %v2656, %v2704
        %v2706 = vpop.f32.mrf.mxu0
        %v2707 = vadd.f32 %v2658, %v2706
        %2708 = vmatmul.bf16.gmra.mxu0 %v2307
        %v2709 = vpop.f32.mrf.mxu0
        %v2710 = vadd.f32 %v2661, %v2709
        %v2711 = vpop.f32.mrf.mxu0
        %v2712 = vadd.f32 %v2663, %v2711
        %2713 = vmatmul.bf16.gmra.mxu0 %v2311
        %v2714 = vpop.f32.mrf.mxu0
        %v2715 = vadd.f32 %v2666, %v2714
        %v2716 = vpop.f32.mrf.mxu0
        %v2717 = vadd.f32 %v2668, %v2716
        %2718 = vmatmul.bf16.gmra.mxu0 %v2315
        %v2719 = vpop.f32.mrf.mxu0
        %v2720 = vadd.f32 %v2671, %v2719
        %v2721 = vpop.f32.mrf.mxu0
        %v2722 = vadd.f32 %v2673, %v2721
        %2723 = vdwg.mxu0
        %2724 = vmatpush.bf16.msra.mxu0 %v2544
        %2725 = vmatpush.bf16.msra.mxu0 %v2543
        %2726 = vmatpush.bf16.msra.mxu0 %v2542
        %2727 = vmatpush.bf16.msra.mxu0 %v2541
        %2728 = vmatpush.bf16.msra.mxu0 %v2540
        %2729 = vmatpush.bf16.msra.mxu0 %v2539
        %2730 = vmatpush.bf16.msra.mxu0 %v2538
        %2731 = vmatpush.bf16.msra.mxu0 %v2537
        %2732 = vmatmul.bf16.gmra.mxu0 %v2288
        %v2733 = vpop.f32.mrf.mxu0
        %v2734 = vadd.f32 %v2685, %v2733
        %v2735 = vpop.f32.mrf.mxu0
        %v2736 = vadd.f32 %v2687, %v2735
        %2737 = vmatmul.bf16.gmra.mxu0 %v2292
        %v2738 = vpop.f32.mrf.mxu0
        %v2739 = vadd.f32 %v2690, %v2738
        %v2740 = vpop.f32.mrf.mxu0
        %v2741 = vadd.f32 %v2692, %v2740
        %2742 = vmatmul.bf16.gmra.mxu0 %v2296
        %v2743 = vpop.f32.mrf.mxu0
        %v2744 = vadd.f32 %v2695, %v2743
        %v2745 = vpop.f32.mrf.mxu0
        %v2746 = vadd.f32 %v2697, %v2745
        %2747 = vmatmul.bf16.gmra.mxu0 %v2300
        %v2748 = vpop.f32.mrf.mxu0
        %v2749 = vadd.f32 %v2700, %v2748
        %v2750 = vpop.f32.mrf.mxu0
        %v2751 = vadd.f32 %v2702, %v2750
        %2752 = vmatmul.bf16.gmra.mxu0 %v2304
        %v2753 = vpop.f32.mrf.mxu0
        %v2754 = vadd.f32 %v2705, %v2753
        %v2755 = vpop.f32.mrf.mxu0
        %v2756 = vadd.f32 %v2707, %v2755
        %2757 = vmatmul.bf16.gmra.mxu0 %v2308
        %v2758 = vpop.f32.mrf.mxu0
        %v2759 = vadd.f32 %v2710, %v2758
        %v2760 = vpop.f32.mrf.mxu0
        %v2761 = vadd.f32 %v2712, %v2760
        %2762 = vmatmul.bf16.gmra.mxu0 %v2312
        %v2763 = vpop.f32.mrf.mxu0
        %v2764 = vadd.f32 %v2715, %v2763
        %v2765 = vpop.f32.mrf.mxu0
        %v2766 = vadd.f32 %v2717, %v2765
        %2767 = vmatmul.bf16.gmra.mxu0 %v2316
        %v2768 = vpop.f32.mrf.mxu0
        %v2769 = vadd.f32 %v2720, %v2768
        %v2770 = vpop.f32.mrf.mxu0
        %v2771 = vadd.f32 %v2722, %v2770
        %2772 = vdwg.mxu0
        %2773 = vst [vmem:[%s220] sm:$0xff] %v2734
        %2774 = vst [vmem:[%s220 + $0x8] sm:$0xff] %v2736
        %2775 = vst [vmem:[%s220 + $0x10] sm:$0xff] %v2739
        %2776 = vst [vmem:[%s220 + $0x18] sm:$0xff] %v2741
        %2777 = vst [vmem:[%s220 + $0x20] sm:$0xff] %v2744
        %2778 = vst [vmem:[%s220 + $0x28] sm:$0xff] %v2746
        %2779 = vst [vmem:[%s220 + $0x30] sm:$0xff] %v2749
        %2780 = vst [vmem:[%s220 + $0x38] sm:$0xff] %v2751
        %2781 = vst [vmem:[%s220 + $0x40] sm:$0xff] %v2754
        %2782 = vst [vmem:[%s220 + $0x48] sm:$0xff] %v2756
        %2783 = vst [vmem:[%s220 + $0x50] sm:$0xff] %v2759
        %2784 = vst [vmem:[%s220 + $0x58] sm:$0xff] %v2761
        %2785 = vst [vmem:[%s220 + $0x60] sm:$0xff] %v2764
        %2786 = vst [vmem:[%s220 + $0x68] sm:$0xff] %v2766
        %2787 = vst [vmem:[%s220 + $0x70] sm:$0xff] %v2769
        %2788 = vst [vmem:[%s220 + $0x78] sm:$0xff] %v2771
        %s2789 = sand.u32 %s116, 1
        %s2790 = scalar_lea.sflag [#allocation4], %s2789
        %s2791 = sand.u32 %s116, 1
        %s2792 = smul.addr %s2791, 128
        %s2793 = scalar_lea.vmem [#allocation5], %s2792
        // Predicated region
        $region41: #{feed_forward_module.1} parent=35 // pred_check
          %p2794 = pneg %p126
        $region42: #{feed_forward_module.1} parent=35 // pred_check_branch
          %2796 = sbr.rel (%p2794) target = $region44
        $region43: #{feed_forward_module.1} parent=35 // pred_region
          %s2797 = smul.u32 16, %s19
          %s2798 = ssub.s32 24, %s2797
          %p2799 = scmp.lt.s32.totalorder %s2798, 16
          %s2800 = scalar_select %p2799, %s2798, 16
          %s2801 = smul.u32 8, %s2800
          %s2802 = ssub.s32 128, %s2801
          %s2803 = sshll.u32 %s2802, 4
          %2804 = vsyncadd %s2790, %s2803
          %p2805 = scmp.ne.s32.totalorder 0, %s2801
          %s2806 = smul.addr %s2797, 8
          %s2807 = scalar_lea.hbm %s4, %s2806
          %s2808 = smul.u32 8, %s2800
          %s2809 = sshll.u32 %s2793, 4
          %s2810 = int_to_ptr.vmem [resolvable:$true] %s2809
          %s2811 = sshll.u32 %s2807, 4
          %s2812 = int_to_ptr.hbm [resolvable:$true] %s2811
          %s2813 = sshll.u32 %s2808, 4
          %2817 = dma.vmem_to_hbm [thread:$0]  (%p2805), %s2810, %s2813, %s2812, %s2790, 128, 128, 8
        $region44: #{feed_forward_module.1} parent=35 // pred_fallthru
          _
      $region36: #{feed_forward_module.1} parent=5 // pred_fallthru
        _
      %p2818 = scmp.le.s32.totalorder 2, %s14
      // Predicated region
      $region45: #{feed_forward_module.1} parent=5 // pred_check
        %p2819 = pneg %p2818
      $region46: #{feed_forward_module.1} parent=5 // pred_check_branch
        %2821 = sbr.rel (%p2819) target = $region48
      $region47: #{feed_forward_module.1} parent=5 // pred_region
        %s2822 = ssub.s32 %s14, 2
        // Predicated region
        $region49: #{feed_forward_module.1} parent=47 // pred_check
          %p2823 = pneg %p132
        $region50: #{feed_forward_module.1} parent=47 // pred_check_branch
          %2825 = sbr.rel (%p2823) target = $region52
        $region51: #{feed_forward_module.1} parent=47 // pred_region
          %s2826 = sand.u32 %s117, 1
          %s2827 = scalar_lea.sflag [#allocation4], %s2826
          %s2828 = sand.u32 %s117, 1
          %s2829 = smul.addr %s2828, 128
          %s2830 = scalar_lea.vmem [#allocation5], %s2829
          %2832 = dma.done %s2827, 2048
        $region52: #{feed_forward_module.1} parent=47 // pred_fallthru
          _
      $region48: #{feed_forward_module.1} parent=5 // pred_fallthru
        _
    $region6: #{feed_forward_module.1} parent=1 // loop_footer
      %s18 = sadd.s32 1, %s14
    $region7: #{feed_forward_module.1} parent=1 // loop_footer_branch
      %13 = sbr.rel target = $region3
    $region8: #{feed_forward_module.1} parent=1 // loop_exit
      _
    %2833 = vsyncpa [#allocation3], 1
    %s2834 = scalar_lea.sflag [#allocation3], 1
    %2835 = vsyncpa %s2834, 1
    %2836 = vsyncpa [#allocation4], 1
    %s2837 = scalar_lea.sflag [#allocation4], 1
    %2838 = vsyncpa %s2837, 1

</llo_original>
